<compile_context>
chip_gen: v7x
topology: tpu7x:2x2x1
jax: 0.10.0
libtpu: 0.0.40
codegen_flags: <defaults>
</compile_context>

<pallas_src>
import functools
import math

import jax
import jax.numpy as jnp
from jax.experimental import pallas as pl
from jax.experimental.pallas import tpu as pltpu


def _round_up(x, m):
    return (x + m - 1) // m * m


def _actor_kernel(obs_ref, w1_ref, b1_ref, w2_ref, b2_ref,
                  whead_ref, bhead_ref, noise_ref, out_ref, *, dim_action):
    D = dim_action

    # hidden MLP: relu(x @ W + b), two layers (weights resident across steps)
    x = obs_ref[...]
    x = jnp.maximum(
        jnp.dot(x, w1_ref[...], preferred_element_type=jnp.float32) + b1_ref[...], 0.0)
    x = jnp.maximum(
        jnp.dot(x, w2_ref[...], preferred_element_type=jnp.float32) + b2_ref[...], 0.0)

    # fused heads: one matmul produces [mu | logsig]
    heads = jnp.dot(x, whead_ref[...],
                    preferred_element_type=jnp.float32) + bhead_ref[...]
    mu = heads[:, :D]
    logsig = heads[:, D:2 * D]

    noise = noise_ref[...]
    sig = jnp.exp(logsig)
    u = mu + sig * noise
    a = jnp.tanh(u)
    tanh_mu = jnp.tanh(mu)

    # log-prob — exact algebraic rewrite of the PyTorch formula:
    #   (u - mu) / sig == noise      -> Mahalanobis term == sum(noise^2)
    #   log(sig^2)     == 2 * logsig -> no exp->log roundtrip
    # one fused lane reduction:
    #   logProba = -0.5*D*ln(2*pi)
    #              - sum(logsig + 0.5*noise^2 + log(1 - a^2 + 1e-6), axis=1)
    const = -0.5 * D * math.log(2.0 * math.pi)
    per_elem = logsig + 0.5 * noise * noise + jnp.log(1.0 - a * a + 1e-6)
    logp = const - jnp.sum(per_elem, axis=1, keepdims=True)

    # Narrow lane-dense output slab [a | tanh(mu) | logProba]; the block width
    # equals the full array width (2*D+1), so there are no pad lanes to fill
    # and no full-tile zero-fill epilogue.
    out_ref[:, 0:D] = a
    out_ref[:, D:2 * D] = tanh_mu
    out_ref[:, 2 * D:2 * D + 1] = logp


def actor_forward(obs, params, noise, *, batch_tile=512):
    """obs: [B, dim_obs] f32, noise: [B, dim_action] f32 (std-normal draws)."""
    B, dim_obs = obs.shape
    dim_action = noise.shape[1]

    # Batch tiling: the smallest number of grid steps whose tile fits
    # `batch_tile`; tile rounded up to a multiple of 8 (sublane rule).
    # B=200 -> one (208, ...) block instead of two 128-row steps.
    n_steps = max(1, -(-B // batch_tile))
    TB = _round_up(-(-B // n_steps), 8)
    pB = n_steps * TB
    if pB != B:
        obs = jnp.pad(obs, ((0, pB - B), (0, 0)))
        noise = jnp.pad(noise, ((0, pB - B), (0, 0)))

    OUT_W = 2 * dim_action + 1   # [a | tanh(mu) | logProba]

    def batch_spec(shape):
        return pl.BlockSpec(shape, lambda i: (i, 0))

    def const_spec(shape):
        return pl.BlockSpec(shape, lambda i: (0, 0))

    in_specs = [
        batch_spec((TB, dim_obs)),              # obs (pipelined per step)
        const_spec(params["w1"].shape),         # weights/biases stay resident
        const_spec(params["b1"].shape),
        const_spec(params["w2"].shape),
        const_spec(params["b2"].shape),
        const_spec(params["whead"].shape),
        const_spec(params["bhead"].shape),
        batch_spec((TB, dim_action)),           # noise (pipelined per step)
    ]
    out_spec = pl.BlockSpec((TB, OUT_W), lambda i: (i, 0))

    packed = pl.pallas_call(
        functools.partial(_actor_kernel, dim_action=dim_action),
        out_shape=jax.ShapeDtypeStruct((pB, OUT_W), jnp.float32),
        grid_spec=pltpu.PrefetchScalarGridSpec(
            num_scalar_prefetch=0,
            grid=(n_steps,),
            in_specs=in_specs,
            out_specs=out_spec,
        ),
        compiler_params=pltpu.CompilerParams(
            dimension_semantics=("parallel",)),   # shards steps across TCs
    )(obs, params["w1"], params["b1"], params["w2"], params["b2"],
      params["whead"], params["bhead"], noise)

    a = packed[:B, 0:dim_action]
    tanh_mu = packed[:B, dim_action:2 * dim_action]
    logp = packed[:B, 2 * dim_action:2 * dim_action + 1]
    return a, logp, tanh_mu


def _xavier_uniform(key, fan_in, fan_out):
    # matches torch.nn.init.xavier_uniform_ (gain=1), stored transposed [in, out]
    limit = math.sqrt(6.0 / (fan_in + fan_out))
    return jax.random.uniform(key, (fan_in, fan_out), jnp.float32,
                              minval=-limit, maxval=limit)


def init_actor_params(key, dim_obs, dim_action, dims_hidden=(64, 64)):
    k1, k2, k3, k4 = jax.random.split(key, 4)
    h1, h2 = dims_hidden
    wmu = _xavier_uniform(k3, h2, dim_action)
    wls = _xavier_uniform(k4, h2, dim_action)
    return {
        "w1": _xavier_uniform(k1, dim_obs, h1),
        "b1": jnp.zeros((1, h1), jnp.float32),
        "w2": _xavier_uniform(k2, h1, h2),
        "b2": jnp.zeros((1, h2), jnp.float32),
        # mu / logsig heads fused once at init time -> one [h2, 2*D] matmul
        # in-kernel and no per-call concatenation in the wrapper.
        "whead": jnp.concatenate([wmu, wls], axis=1),
        "bhead": jnp.zeros((1, 2 * dim_action), jnp.float32),
    }


if __name__ == "__main__":
    B, DIM_OBS, DIM_ACTION = 200, 32, 8      # single (208, ...) grid step
    DIMS_HIDDEN = (64, 64)

    key = jax.random.PRNGKey(0)
    k_params, k_obs, k_noise = jax.random.split(key, 3)

    params = init_actor_params(k_params, DIM_OBS, DIM_ACTION, DIMS_HIDDEN)
    obs = jax.random.normal(k_obs, (B, DIM_OBS), jnp.float32)
    noise = jax.random.normal(k_noise, (B, DIM_ACTION), jnp.float32)

    fwd = jax.jit(functools.partial(actor_forward, batch_tile=512))
    a, logProba, tanh_mu = fwd(obs, params, noise)
    jax.block_until_ready((a, logProba, tanh_mu))

    # Pure-JAX reference of the original (unsimplified) PyTorch math.
    def ref(obs, p, noise):
        D = noise.shape[1]
        x = jnp.maximum(obs @ p["w1"] + p["b1"], 0.0)
        x = jnp.maximum(x @ p["w2"] + p["b2"], 0.0)
        heads = x @ p["whead"] + p["bhead"]
        mu = heads[:, :D]
        sig = jnp.exp(heads[:, D:2 * D])
        u = mu + sig * noise
        a = jnp.tanh(u)
        ln2pi = math.log(2.0 * math.pi)
        lpu = -0.5 * (jnp.sum(jnp.log(sig ** 2), 1, keepdims=True)
                      + jnp.sum((u - mu) ** 2 / sig ** 2, 1, keepdims=True)
                      + D * ln2pi)
        lpa = lpu - jnp.sum(jnp.log(1 - a ** 2 + 1e-6), 1, keepdims=True)
        return a, lpa, jnp.tanh(mu)

    ra, rlp, rtm = ref(obs, params, noise)
    assert a.shape == (B, DIM_ACTION) and logProba.shape == (B, 1)
    assert tanh_mu.shape == (B, DIM_ACTION)

    # a / tanh(mu) are bounded in [-1, 1]; tolerance covers possible precision
    # differences between the Mosaic f32 matmul path and XLA's default matmul.
    assert jnp.allclose(a, ra, atol=3e-2), "a mismatch"
    assert jnp.allclose(tanh_mu, rtm, atol=3e-2), "tanh(mu) mismatch"

    # logProba is ill-conditioned wherever tanh(u) saturates:
    #   |d/da log(1 - a^2 + 1e-6)| = 2|a| / (1 - a^2 + 1e-6)  can reach ~2e6,
    # so tiny kernel-vs-reference differences in `a` are hugely amplified.
    # Compare with a conditioning-aware per-row bound (first-order sensitivity
    # x measured action error, with an 8x safety factor + small base term).
    a_err = jnp.max(jnp.abs(a - ra))
    sens = jnp.sum(2.0 * jnp.abs(ra) / (1.0 - ra * ra + 1e-6),
                   axis=1, keepdims=True)
    tol = 0.15 + 8.0 * sens * a_err
    assert bool(jnp.all(jnp.abs(logProba - rlp) <= tol)), "logProba mismatch"

    print("KERNEL_OK")
</pallas_src>

<mosaic_0001>
module attributes {stable_mosaic.version = 11 : i64} {
  func.func @_actor_kernel(%arg0: i32, %arg1: memref<200x32xf32, #tpu.memory_space<vmem>>, %arg2: memref<32x64xf32, #tpu.memory_space<vmem>>, %arg3: memref<1x64xf32, #tpu.memory_space<vmem>>, %arg4: memref<64x64xf32, #tpu.memory_space<vmem>>, %arg5: memref<1x64xf32, #tpu.memory_space<vmem>>, %arg6: memref<64x16xf32, #tpu.memory_space<vmem>>, %arg7: memref<1x16xf32, #tpu.memory_space<vmem>>, %arg8: memref<200x8xf32, #tpu.memory_space<vmem>>, %arg9: memref<200x17xf32, #tpu.memory_space<vmem>>) attributes {dimension_semantics = [#tpu.dimension_semantics<parallel>], iteration_bounds = array<i64: 1>, scalar_prefetch = 0 : i64, scratch_operands = 0 : i64, tpu.core_type = #tpu.core_type<tc>, window_params = [{transform_indices = @transform_0, window_bounds = array<i64: 200, 32>}, {pipeline_mode = #tpu.pipeline_mode<synchronous>, transform_indices = @transform_1, window_bounds = array<i64: 32, 64>}, {pipeline_mode = #tpu.pipeline_mode<synchronous>, transform_indices = @transform_2, window_bounds = array<i64: 1, 64>}, {pipeline_mode = #tpu.pipeline_mode<synchronous>, transform_indices = @transform_3, window_bounds = array<i64: 64, 64>}, {pipeline_mode = #tpu.pipeline_mode<synchronous>, transform_indices = @transform_4, window_bounds = array<i64: 1, 64>}, {pipeline_mode = #tpu.pipeline_mode<synchronous>, transform_indices = @transform_5, window_bounds = array<i64: 64, 16>}, {pipeline_mode = #tpu.pipeline_mode<synchronous>, transform_indices = @transform_6, window_bounds = array<i64: 1, 16>}, {transform_indices = @transform_7, window_bounds = array<i64: 200, 8>}, {transform_indices = @transform_8, window_bounds = array<i64: 200, 17>}]} {
    %c0 = arith.constant 0 : index
    %c0_0 = arith.constant 0 : index
    %0 = vector.load %arg1[%c0, %c0_0] : memref<200x32xf32, #tpu.memory_space<vmem>>, vector<200x32xf32>
    %c0_1 = arith.constant 0 : index
    %c0_2 = arith.constant 0 : index
    %1 = vector.load %arg2[%c0_1, %c0_2] : memref<32x64xf32, #tpu.memory_space<vmem>>, vector<32x64xf32>
    %cst = arith.constant dense<0.000000e+00> : vector<200x64xf32>
    %2 = tpu.matmul %0, %1, %cst {dimension_numbers = #tpu.dot_dimension_numbers<[1], [0], [0], [1], [0, 0, 1, 1], [], []>} : vector<200x32xf32>, vector<32x64xf32>, vector<200x64xf32> -> vector<200x64xf32>
    %c0_3 = arith.constant 0 : index
    %c0_4 = arith.constant 0 : index
    %3 = vector.load %arg3[%c0_3, %c0_4] : memref<1x64xf32, #tpu.memory_space<vmem>>, vector<1x64xf32>
    %4 = vector.broadcast %3 : vector<1x64xf32> to vector<200x64xf32>
    %5 = arith.addf %2, %4 : vector<200x64xf32>
    %cst_5 = arith.constant 0.000000e+00 : f32
    %6 = vector.broadcast %cst_5 : f32 to vector<200x64xf32>
    %7 = arith.maximumf %5, %6 : vector<200x64xf32>
    %c0_6 = arith.constant 0 : index
    %c0_7 = arith.constant 0 : index
    %8 = vector.load %arg4[%c0_6, %c0_7] : memref<64x64xf32, #tpu.memory_space<vmem>>, vector<64x64xf32>
    %cst_8 = arith.constant dense<0.000000e+00> : vector<200x64xf32>
    %9 = tpu.matmul %7, %8, %cst_8 {dimension_numbers = #tpu.dot_dimension_numbers<[1], [0], [0], [1], [0, 0, 1, 1], [], []>} : vector<200x64xf32>, vector<64x64xf32>, vector<200x64xf32> -> vector<200x64xf32>
    %c0_9 = arith.constant 0 : index
    %c0_10 = arith.constant 0 : index
    %10 = vector.load %arg5[%c0_9, %c0_10] : memref<1x64xf32, #tpu.memory_space<vmem>>, vector<1x64xf32>
    %11 = vector.broadcast %10 : vector<1x64xf32> to vector<200x64xf32>
    %12 = arith.addf %9, %11 : vector<200x64xf32>
    %cst_11 = arith.constant 0.000000e+00 : f32
    %13 = vector.broadcast %cst_11 : f32 to vector<200x64xf32>
    %14 = arith.maximumf %12, %13 : vector<200x64xf32>
    %c0_12 = arith.constant 0 : index
    %c0_13 = arith.constant 0 : index
    %15 = vector.load %arg6[%c0_12, %c0_13] : memref<64x16xf32, #tpu.memory_space<vmem>>, vector<64x16xf32>
    %cst_14 = arith.constant dense<0.000000e+00> : vector<200x16xf32>
    %16 = tpu.matmul %14, %15, %cst_14 {dimension_numbers = #tpu.dot_dimension_numbers<[1], [0], [0], [1], [0, 0, 1, 1], [], []>} : vector<200x64xf32>, vector<64x16xf32>, vector<200x16xf32> -> vector<200x16xf32>
    %c0_15 = arith.constant 0 : index
    %c0_16 = arith.constant 0 : index
    %17 = vector.load %arg7[%c0_15, %c0_16] : memref<1x16xf32, #tpu.memory_space<vmem>>, vector<1x16xf32>
    %18 = vector.broadcast %17 : vector<1x16xf32> to vector<200x16xf32>
    %19 = arith.addf %16, %18 : vector<200x16xf32>
    %20 = vector.extract_strided_slice %19 {offsets = [0, 0], sizes = [200, 8], strides = [1, 1]} : vector<200x16xf32> to vector<200x8xf32>
    %21 = vector.extract_strided_slice %19 {offsets = [0, 8], sizes = [200, 8], strides = [1, 1]} : vector<200x16xf32> to vector<200x8xf32>
    %c0_17 = arith.constant 0 : index
    %c0_18 = arith.constant 0 : index
    %22 = vector.load %arg8[%c0_17, %c0_18] : memref<200x8xf32, #tpu.memory_space<vmem>>, vector<200x8xf32>
    %23 = math.exp %21 : vector<200x8xf32>
    %24 = arith.mulf %23, %22 : vector<200x8xf32>
    %25 = arith.addf %20, %24 : vector<200x8xf32>
    %26 = math.tanh %25 : vector<200x8xf32>
    %27 = math.tanh %20 : vector<200x8xf32>
    %cst_19 = arith.constant 5.000000e-01 : f32
    %28 = vector.broadcast %cst_19 : f32 to vector<200x8xf32>
    %29 = arith.mulf %28, %22 : vector<200x8xf32>
    %30 = arith.mulf %29, %22 : vector<200x8xf32>
    %31 = arith.addf %21, %30 : vector<200x8xf32>
    %32 = arith.mulf %26, %26 : vector<200x8xf32>
    %cst_20 = arith.constant 1.000000e+00 : f32
    %33 = vector.broadcast %cst_20 : f32 to vector<200x8xf32>
    %34 = arith.subf %33, %32 : vector<200x8xf32>
    %cst_21 = arith.constant 9.99999997E-7 : f32
    %35 = vector.broadcast %cst_21 : f32 to vector<200x8xf32>
    %36 = arith.addf %34, %35 : vector<200x8xf32>
    %37 = math.log %36 : vector<200x8xf32>
    %38 = arith.addf %31, %37 : vector<200x8xf32>
    %cst_22 = arith.constant dense<0.000000e+00> : vector<200xf32>
    %39 = vector.multi_reduction <add>, %38, %cst_22 [1] : vector<200x8xf32> to vector<200xf32>
    %40 = vector.shape_cast %39 : vector<200xf32> to vector<200x1xf32>
    %cst_23 = arith.constant -7.35150814 : f32
    %41 = vector.broadcast %cst_23 : f32 to vector<200x1xf32>
    %42 = arith.subf %41, %40 : vector<200x1xf32>
    %c0_24 = arith.constant 0 : index
    %c0_25 = arith.constant 0 : index
    %43 = vector.load %arg9[%c0_24, %c0_25] : memref<200x17xf32, #tpu.memory_space<vmem>>, vector<200x8xf32>
    tpu.vector_store %arg9[%c0_24, %c0_25], %26 {strides = array<i32>} : memref<200x17xf32, #tpu.memory_space<vmem>>, vector<200x8xf32>,
    %c0_26 = arith.constant 0 : index
    %c8 = arith.constant 8 : index
    %44 = vector.load %arg9[%c0_26, %c8] : memref<200x17xf32, #tpu.memory_space<vmem>>, vector<200x8xf32>
    tpu.vector_store %arg9[%c0_26, %c8], %27 {strides = array<i32>} : memref<200x17xf32, #tpu.memory_space<vmem>>, vector<200x8xf32>,
    %c0_27 = arith.constant 0 : index
    %c16 = arith.constant 16 : index
    %45 = vector.load %arg9[%c0_27, %c16] : memref<200x17xf32, #tpu.memory_space<vmem>>, vector<200x1xf32>
    tpu.vector_store %arg9[%c0_27, %c16], %42 {strides = array<i32>} : memref<200x17xf32, #tpu.memory_space<vmem>>, vector<200x1xf32>,
    return
  }
  func.func @transform_0(%arg0: i32) -> (i32, i32) {
    %c0_i32 = arith.constant 0 : i32
    %c0_i32_0 = arith.constant 0 : i32
    return %arg0, %c0_i32 : i32, i32
  }
  func.func @transform_1(%arg0: i32) -> (i32, i32) {
    %c0_i32 = arith.constant 0 : i32
    %c0_i32_0 = arith.constant 0 : i32
    %c0_i32_1 = arith.constant 0 : i32
    return %c0_i32, %c0_i32_0 : i32, i32
  }
  func.func @transform_2(%arg0: i32) -> (i32, i32) {
    %c0_i32 = arith.constant 0 : i32
    %c0_i32_0 = arith.constant 0 : i32
    %c0_i32_1 = arith.constant 0 : i32
    return %c0_i32, %c0_i32_0 : i32, i32
  }
  func.func @transform_3(%arg0: i32) -> (i32, i32) {
    %c0_i32 = arith.constant 0 : i32
    %c0_i32_0 = arith.constant 0 : i32
    %c0_i32_1 = arith.constant 0 : i32
    return %c0_i32, %c0_i32_0 : i32, i32
  }
  func.func @transform_4(%arg0: i32) -> (i32, i32) {
    %c0_i32 = arith.constant 0 : i32
    %c0_i32_0 = arith.constant 0 : i32
    %c0_i32_1 = arith.constant 0 : i32
    return %c0_i32, %c0_i32_0 : i32, i32
  }
  func.func @transform_5(%arg0: i32) -> (i32, i32) {
    %c0_i32 = arith.constant 0 : i32
    %c0_i32_0 = arith.constant 0 : i32
    %c0_i32_1 = arith.constant 0 : i32
    return %c0_i32, %c0_i32_0 : i32, i32
  }
  func.func @transform_6(%arg0: i32) -> (i32, i32) {
    %c0_i32 = arith.constant 0 : i32
    %c0_i32_0 = arith.constant 0 : i32
    %c0_i32_1 = arith.constant 0 : i32
    return %c0_i32, %c0_i32_0 : i32, i32
  }
  func.func @transform_7(%arg0: i32) -> (i32, i32) {
    %c0_i32 = arith.constant 0 : i32
    %c0_i32_0 = arith.constant 0 : i32
    return %arg0, %c0_i32 : i32, i32
  }
  func.func @transform_8(%arg0: i32) -> (i32, i32) {
    %c0_i32 = arith.constant 0 : i32
    %c0_i32_0 = arith.constant 0 : i32
    return %arg0, %c0_i32 : i32, i32
  }
}

</mosaic_0001>

<llo_original>
// kernel: actor_forward.1
$region0: #{actor_forward.1}
  #allocation0 [shape = 'u32[]', space=smem, size = 0x4, offset = 0x4, fixed_abs, tag = 'smem constant byte address 0x4 - core index']
  #allocation1 [shape = 'u32[144,128]{1,0:T(1,128)}', space=vmem, size = 0x12000, scoped, tag = 'internal scratch']
  %s0 = inlined_call_operand.vmem [shape: f32[200,32], index: 0, kind: input, shape index: {}]
  %s1 = inlined_call_operand.vmem [shape: f32[32,64], index: 1, kind: input, shape index: {}]
  %s2 = inlined_call_operand.vmem [shape: f32[1,64], index: 2, kind: input, shape index: {}]
  %s3 = inlined_call_operand.vmem [shape: f32[64,64], index: 3, kind: input, shape index: {}]
  %s4 = inlined_call_operand.vmem [shape: f32[1,64], index: 4, kind: input, shape index: {}]
  %s5 = inlined_call_operand.vmem [shape: f32[64,16], index: 5, kind: input, shape index: {}]
  %s6 = inlined_call_operand.vmem [shape: f32[1,16], index: 6, kind: input, shape index: {}]
  %s7 = inlined_call_operand.vmem [shape: f32[200,8], index: 7, kind: input, shape index: {}]
  %s8 = inlined_call_operand.vmem [shape: f32[200,17], index: 8, kind: output, shape index: {}]
  %s9 = sld [smem:[#allocation0]]
  $region42: #{actor_forward.1} parent=0
    _
  %s11 = ssub.s32 1, %s9
  %s12 = scalar_select 0, %s11, %s9
  // Predicated region
  $region2: #{actor_forward.1} parent=0 // pred_check
    _
  $region3: #{actor_forward.1} parent=0 // pred_check_branch
    %14 = sbr.rel (0) target = $region5
  $region4: #{actor_forward.1} parent=0 // pred_region
    _
  $region5: #{actor_forward.1} parent=0 // pred_fallthru
    _
  // Predicated region
  $region6: #{actor_forward.1} parent=0 // pred_check
    _
  $region7: #{actor_forward.1} parent=0 // pred_check_branch
    %16 = sbr.rel (0) target = $region9
  $region8: #{actor_forward.1} parent=0 // pred_region
    _
  $region9: #{actor_forward.1} parent=0 // pred_fallthru
    _
  // Predicated region
  $region10: #{actor_forward.1} parent=0 // pred_check
    _
  $region11: #{actor_forward.1} parent=0 // pred_check_branch
    %18 = sbr.rel (0) target = $region13
  $region12: #{actor_forward.1} parent=0 // pred_region
    _
  $region13: #{actor_forward.1} parent=0 // pred_fallthru
    _
  // Predicated region
  $region14: #{actor_forward.1} parent=0 // pred_check
    _
  $region15: #{actor_forward.1} parent=0 // pred_check_branch
    %20 = sbr.rel (0) target = $region17
  $region16: #{actor_forward.1} parent=0 // pred_region
    _
  $region17: #{actor_forward.1} parent=0 // pred_fallthru
    _
  // Predicated region
  $region18: #{actor_forward.1} parent=0 // pred_check
    _
  $region19: #{actor_forward.1} parent=0 // pred_check_branch
    %22 = sbr.rel (0) target = $region21
  $region20: #{actor_forward.1} parent=0 // pred_region
    _
  $region21: #{actor_forward.1} parent=0 // pred_fallthru
    _
  // Predicated region
  $region22: #{actor_forward.1} parent=0 // pred_check
    _
  $region23: #{actor_forward.1} parent=0 // pred_check_branch
    %24 = sbr.rel (0) target = $region25
  $region24: #{actor_forward.1} parent=0 // pred_region
    _
  $region25: #{actor_forward.1} parent=0 // pred_fallthru
    _
  // Predicated region
  $region26: #{actor_forward.1} parent=0 // pred_check
    _
  $region27: #{actor_forward.1} parent=0 // pred_check_branch
    %26 = sbr.rel (0) target = $region29
  $region28: #{actor_forward.1} parent=0 // pred_region
    _
  $region29: #{actor_forward.1} parent=0 // pred_fallthru
    _
  // Predicated region
  $region30: #{actor_forward.1} parent=0 // pred_check
    _
  $region31: #{actor_forward.1} parent=0 // pred_check_branch
    %28 = sbr.rel (0) target = $region33
  $region32: #{actor_forward.1} parent=0 // pred_region
    _
  $region33: #{actor_forward.1} parent=0 // pred_fallthru
    _
  %v29 = vld [vmem:[%s0] sm:$0xff]
  %v30 = vld [vmem:[%s0 + $0x8] sm:$0xff]
  %v31 = vld [vmem:[%s0 + $0x10] sm:$0xff]
  %v32 = vld [vmem:[%s0 + $0x18] sm:$0xff]
  %v33 = vld [vmem:[%s0 + $0x20] sm:$0xff]
  %v34 = vld [vmem:[%s0 + $0x28] sm:$0xff]
  %v35 = vld [vmem:[%s0 + $0x30] sm:$0xff]
  %v36 = vld [vmem:[%s0 + $0x38] sm:$0xff]
  %v37 = vld [vmem:[%s0 + $0x40] sm:$0xff]
  %v38 = vld [vmem:[%s0 + $0x48] sm:$0xff]
  %v39 = vld [vmem:[%s0 + $0x50] sm:$0xff]
  %v40 = vld [vmem:[%s0 + $0x58] sm:$0xff]
  %v41 = vld [vmem:[%s0 + $0x60] sm:$0xff]
  %v42 = vld [vmem:[%s0 + $0x68] sm:$0xff]
  %v43 = vld [vmem:[%s0 + $0x70] sm:$0xff]
  %v44 = vld [vmem:[%s0 + $0x78] sm:$0xff]
  %v45 = vld [vmem:[%s0 + $0x80] sm:$0xff]
  %v46 = vld [vmem:[%s0 + $0x88] sm:$0xff]
  %v47 = vld [vmem:[%s0 + $0x90] sm:$0xff]
  %v48 = vld [vmem:[%s0 + $0x98] sm:$0xff]
  %v49 = vld [vmem:[%s0 + $0xa0] sm:$0xff]
  %v50 = vld [vmem:[%s0 + $0xa8] sm:$0xff]
  %v51 = vld [vmem:[%s0 + $0xb0] sm:$0xff]
  %v52 = vld [vmem:[%s0 + $0xb8] sm:$0xff]
  %v53 = vld [vmem:[%s0 + $0xc0] sm:$0xff]
  %v54 = vld [vmem:[%s1] sm:$0xff]
  %v55 = vld [vmem:[%s1 + $0x8] sm:$0xff]
  %v56 = vld [vmem:[%s1 + $0x10] sm:$0xff]
  %v57 = vld [vmem:[%s1 + $0x18] sm:$0xff]
  %v58 = vld [vmem:[%s2] sm:$0x1]
  %v60 = vlaneseq
  %v61 = vshrl.u32 %v60, 7
  %v62 = vsub.s32 0, %v61
  %v63 = vrot.slane %v58, %v62
  %vm65 = vcmask 261120
  %v67 = vsel %vm65, %v29, 0
  %v70 = vsel %vm65, %v30, 0
  %v73 = vsel %vm65, %v31, 0
  %v76 = vsel %vm65, %v32, 0
  %v79 = vsel %vm65, %v33, 0
  %v82 = vsel %vm65, %v34, 0
  %v85 = vsel %vm65, %v35, 0
  %v88 = vsel %vm65, %v36, 0
  %v91 = vsel %vm65, %v37, 0
  %v94 = vsel %vm65, %v38, 0
  %v97 = vsel %vm65, %v39, 0
  %v100 = vsel %vm65, %v40, 0
  %v103 = vsel %vm65, %v41, 0
  %v106 = vsel %vm65, %v42, 0
  %v109 = vsel %vm65, %v43, 0
  %v112 = vsel %vm65, %v44, 0
  %v115 = vsel %vm65, %v45, 0
  %v118 = vsel %vm65, %v46, 0
  %v121 = vsel %vm65, %v47, 0
  %v124 = vsel %vm65, %v48, 0
  %v127 = vsel %vm65, %v49, 0
  %v130 = vsel %vm65, %v50, 0
  %v133 = vsel %vm65, %v51, 0
  %v136 = vsel %vm65, %v52, 0
  %v139 = vsel %vm65, %v53, 0
  %141 = vmatprep.subr.mxu0 0.0
  %142 = vmatpush1.msra.mxu0 %v54
  %143 = vmatprep.subr.mxu0 0.0
  %144 = vmatpush1.msra.mxu0 %v55
  %145 = vmatprep.subr.mxu0 0.0
  %146 = vmatpush1.msra.mxu0 %v56
  %147 = vmatprep.subr.mxu0 0.0
  %148 = vmatpush1.msra.mxu0 %v57
  %149 = vmatprep.subr.mxu0 0.0
  %150 = vmatpush1.msra.mxu0 0.0
  %151 = vmatprep.subr.mxu0 0.0
  %152 = vmatpush1.msra.mxu0 0.0
  %153 = vmatprep.subr.mxu0 0.0
  %154 = vmatpush1.msra.mxu0 0.0
  %155 = vmatprep.subr.mxu0 0.0
  %156 = vmatpush1.msra.mxu0 0.0
  %157 = vmatprep.subr.mxu0 0.0
  %158 = vmatpush1.msra.mxu0 0.0
  %159 = vmatprep.subr.mxu0 0.0
  %160 = vmatpush1.msra.mxu0 0.0
  %161 = vmatprep.subr.mxu0 0.0
  %162 = vmatpush1.msra.mxu0 0.0
  %163 = vmatprep.subr.mxu0 0.0
  %164 = vmatpush1.msra.mxu0 0.0
  %165 = vmatprep.subr.mxu0 0.0
  %166 = vmatpush1.msra.mxu0 0.0
  %167 = vmatprep.subr.mxu0 0.0
  %168 = vmatpush1.msra.mxu0 0.0
  %169 = vmatprep.subr.mxu0 0.0
  %170 = vmatpush1.msra.mxu0 0.0
  %171 = vmatprep.subr.mxu0 0.0
  %172 = vmatpush1.msra.mxu0 0.0
  %173 = vmatprep.subr.mxu0 0.0
  %174 = vmatpush1.msra.mxu0 0.0
  %175 = vmatprep.subr.mxu0 0.0
  %176 = vmatpush1.msra.mxu0 0.0
  %177 = vmatprep.subr.mxu0 0.0
  %178 = vmatpush1.msra.mxu0 0.0
  %179 = vmatprep.subr.mxu0 0.0
  %180 = vmatpush1.msra.mxu0 0.0
  %181 = vmatprep.subr.mxu0 0.0
  %182 = vmatpush1.msra.mxu0 0.0
  %183 = vmatprep.subr.mxu0 0.0
  %184 = vmatpush1.msra.mxu0 0.0
  %185 = vmatprep.subr.mxu0 0.0
  %186 = vmatpush1.msra.mxu0 0.0
  %187 = vmatprep.subr.mxu0 0.0
  %188 = vmatpush1.msra.mxu0 0.0
  %189 = vmatprep.subr.mxu0 0.0
  %190 = vmatpush1.msra.mxu0 0.0
  %191 = vmatprep.subr.mxu0 0.0
  %192 = vmatpush1.msra.mxu0 0.0
  %193 = vmatprep.subr.mxu0 0.0
  %194 = vmatpush1.msra.mxu0 0.0
  %195 = vmatprep.subr.mxu0 0.0
  %196 = vmatpush1.msra.mxu0 0.0
  %197 = vmatprep.subr.mxu0 0.0
  %198 = vmatpush1.msra.mxu0 0.0
  %199 = vmatprep.subr.mxu0 0.0
  %200 = vmatpush1.msra.mxu0 0.0
  %201 = vmatprep.subr.mxu0 0.0
  %202 = vmatpush1.msra.mxu0 0.0
  %203 = vmatprep.subr.mxu0 0.0
  %204 = vmatpush1.msra.mxu0 0.0
  %205 = vmatprep.mubr.f32.mxu0 0.0
  %206 = vmatmul.mubr.f32.gmra.mrb[0].mxu0 %v67
  %v207 = vpop.f32.mrb[0].mxu0
  %v208 = vadd.f32 %v63, %v207
  %v209 = vpop.f32.mrb[0].mxu0
  %210 = vmatprep.mubr.f32.mxu0 0.0
  %211 = vmatmul.mubr.f32.gmra.mrb[0].mxu0 %v70
  %v212 = vpop.f32.mrb[0].mxu0
  %v213 = vadd.f32 %v63, %v212
  %v214 = vpop.f32.mrb[0].mxu0
  %215 = vmatprep.mubr.f32.mxu0 0.0
  %216 = vmatmul.mubr.f32.gmra.mrb[0].mxu0 %v73
  %v217 = vpop.f32.mrb[0].mxu0
  %v218 = vadd.f32 %v63, %v217
  %v219 = vpop.f32.mrb[0].mxu0
  %220 = vmatprep.mubr.f32.mxu0 0.0
  %221 = vmatmul.mubr.f32.gmra.mrb[0].mxu0 %v76
  %v222 = vpop.f32.mrb[0].mxu0
  %v223 = vadd.f32 %v63, %v222
  %v224 = vpop.f32.mrb[0].mxu0
  %225 = vmatprep.mubr.f32.mxu0 0.0
  %226 = vmatmul.mubr.f32.gmra.mrb[0].mxu0 %v79
  %v227 = vpop.f32.mrb[0].mxu0
  %v228 = vadd.f32 %v63, %v227
  %v229 = vpop.f32.mrb[0].mxu0
  %230 = vmatprep.mubr.f32.mxu0 0.0
  %231 = vmatmul.mubr.f32.gmra.mrb[0].mxu0 %v82
  %v232 = vpop.f32.mrb[0].mxu0
  %v233 = vadd.f32 %v63, %v232
  %v234 = vpop.f32.mrb[0].mxu0
  %235 = vmatprep.mubr.f32.mxu0 0.0
  %236 = vmatmul.mubr.f32.gmra.mrb[0].mxu0 %v85
  %v237 = vpop.f32.mrb[0].mxu0
  %v238 = vadd.f32 %v63, %v237
  %v239 = vpop.f32.mrb[0].mxu0
  %240 = vmatprep.mubr.f32.mxu0 0.0
  %241 = vmatmul.mubr.f32.gmra.mrb[0].mxu0 %v88
  %v242 = vpop.f32.mrb[0].mxu0
  %v243 = vadd.f32 %v63, %v242
  %v244 = vpop.f32.mrb[0].mxu0
  %245 = vmatprep.mubr.f32.mxu0 0.0
  %246 = vmatmul.mubr.f32.gmra.mrb[0].mxu0 %v91
  %v247 = vpop.f32.mrb[0].mxu0
  %v248 = vadd.f32 %v63, %v247
  %v249 = vpop.f32.mrb[0].mxu0
  %250 = vmatprep.mubr.f32.mxu0 0.0
  %251 = vmatmul.mubr.f32.gmra.mrb[0].mxu0 %v94
  %v252 = vpop.f32.mrb[0].mxu0
  %v253 = vadd.f32 %v63, %v252
  %v254 = vpop.f32.mrb[0].mxu0
  %255 = vmatprep.mubr.f32.mxu0 0.0
  %256 = vmatmul.mubr.f32.gmra.mrb[0].mxu0 %v97
  %v257 = vpop.f32.mrb[0].mxu0
  %v258 = vadd.f32 %v63, %v257
  %v259 = vpop.f32.mrb[0].mxu0
  %260 = vmatprep.mubr.f32.mxu0 0.0
  %261 = vmatmul.mubr.f32.gmra.mrb[0].mxu0 %v100
  %v262 = vpop.f32.mrb[0].mxu0
  %v263 = vadd.f32 %v63, %v262
  %v264 = vpop.f32.mrb[0].mxu0
  %265 = vmatprep.mubr.f32.mxu0 0.0
  %266 = vmatmul.mubr.f32.gmra.mrb[0].mxu0 %v103
  %v267 = vpop.f32.mrb[0].mxu0
  %v268 = vadd.f32 %v63, %v267
  %v269 = vpop.f32.mrb[0].mxu0
  %270 = vmatprep.mubr.f32.mxu0 0.0
  %271 = vmatmul.mubr.f32.gmra.mrb[0].mxu0 %v106
  %v272 = vpop.f32.mrb[0].mxu0
  %v273 = vadd.f32 %v63, %v272
  %v274 = vpop.f32.mrb[0].mxu0
  %275 = vmatprep.mubr.f32.mxu0 0.0
  %276 = vmatmul.mubr.f32.gmra.mrb[0].mxu0 %v109
  %v277 = vpop.f32.mrb[0].mxu0
  %v278 = vadd.f32 %v63, %v277
  %v279 = vpop.f32.mrb[0].mxu0
  %280 = vmatprep.mubr.f32.mxu0 0.0
  %281 = vmatmul.mubr.f32.gmra.mrb[0].mxu0 %v112
  %v282 = vpop.f32.mrb[0].mxu0
  %v283 = vadd.f32 %v63, %v282
  %v284 = vpop.f32.mrb[0].mxu0
  %285 = vmatprep.mubr.f32.mxu0 0.0
  %286 = vmatmul.mubr.f32.gmra.mrb[0].mxu0 %v115
  %v287 = vpop.f32.mrb[0].mxu0
  %v288 = vadd.f32 %v63, %v287
  %v289 = vpop.f32.mrb[0].mxu0
  %290 = vmatprep.mubr.f32.mxu0 0.0
  %291 = vmatmul.mubr.f32.gmra.mrb[0].mxu0 %v118
  %v292 = vpop.f32.mrb[0].mxu0
  %v293 = vadd.f32 %v63, %v292
  %v294 = vpop.f32.mrb[0].mxu0
  %295 = vmatprep.mubr.f32.mxu0 0.0
  %296 = vmatmul.mubr.f32.gmra.mrb[0].mxu0 %v121
  %v297 = vpop.f32.mrb[0].mxu0
  %v298 = vadd.f32 %v63, %v297
  %v299 = vpop.f32.mrb[0].mxu0
  %300 = vmatprep.mubr.f32.mxu0 0.0
  %301 = vmatmul.mubr.f32.gmra.mrb[0].mxu0 %v124
  %v302 = vpop.f32.mrb[0].mxu0
  %v303 = vadd.f32 %v63, %v302
  %v304 = vpop.f32.mrb[0].mxu0
  %305 = vmatprep.mubr.f32.mxu0 0.0
  %306 = vmatmul.mubr.f32.gmra.mrb[0].mxu0 %v127
  %v307 = vpop.f32.mrb[0].mxu0
  %v308 = vadd.f32 %v63, %v307
  %v309 = vpop.f32.mrb[0].mxu0
  %310 = vmatprep.mubr.f32.mxu0 0.0
  %311 = vmatmul.mubr.f32.gmra.mrb[0].mxu0 %v130
  %v312 = vpop.f32.mrb[0].mxu0
  %v313 = vadd.f32 %v63, %v312
  %v314 = vpop.f32.mrb[0].mxu0
  %315 = vmatprep.mubr.f32.mxu0 0.0
  %316 = vmatmul.mubr.f32.gmra.mrb[0].mxu0 %v133
  %v317 = vpop.f32.mrb[0].mxu0
  %v318 = vadd.f32 %v63, %v317
  %v319 = vpop.f32.mrb[0].mxu0
  %320 = vmatprep.mubr.f32.mxu0 0.0
  %321 = vmatmul.mubr.f32.gmra.mrb[0].mxu0 %v136
  %v322 = vpop.f32.mrb[0].mxu0
  %v323 = vadd.f32 %v63, %v322
  %v324 = vpop.f32.mrb[0].mxu0
  %325 = vmatprep.mubr.f32.mxu0 0.0
  %326 = vmatmul.mubr.f32.gmra.mrb[0].mxu0 %v139
  %v327 = vpop.f32.mrb[0].mxu0
  %v328 = vadd.f32 %v63, %v327
  %v329 = vpop.f32.mrb[0].mxu0
  %330 = vdwg.mxu0
  %v331 = vmax.f32 %v208, 0.0
  %v332 = vmax.f32 %v213, 0.0
  %v333 = vmax.f32 %v218, 0.0
  %v334 = vmax.f32 %v223, 0.0
  %v335 = vmax.f32 %v228, 0.0
  %v336 = vmax.f32 %v233, 0.0
  %v337 = vmax.f32 %v238, 0.0
  %v338 = vmax.f32 %v243, 0.0
  %v339 = vmax.f32 %v248, 0.0
  %v340 = vmax.f32 %v253, 0.0
  %v341 = vmax.f32 %v258, 0.0
  %v342 = vmax.f32 %v263, 0.0
  %v343 = vmax.f32 %v268, 0.0
  %v344 = vmax.f32 %v273, 0.0
  %v345 = vmax.f32 %v278, 0.0
  %v346 = vmax.f32 %v283, 0.0
  %v347 = vmax.f32 %v288, 0.0
  %v348 = vmax.f32 %v293, 0.0
  %v349 = vmax.f32 %v298, 0.0
  %v350 = vmax.f32 %v303, 0.0
  %v351 = vmax.f32 %v308, 0.0
  %v352 = vmax.f32 %v313, 0.0
  %v353 = vmax.f32 %v318, 0.0
  %v354 = vmax.f32 %v323, 0.0
  %v355 = vmax.f32 %v328, 0.0
  %v356 = vld [vmem:[%s3] sm:$0xff]
  %v357 = vld [vmem:[%s3 + $0x8] sm:$0xff]
  %v358 = vld [vmem:[%s3 + $0x10] sm:$0xff]
  %v359 = vld [vmem:[%s3 + $0x18] sm:$0xff]
  %v360 = vld [vmem:[%s3 + $0x20] sm:$0xff]
  %v361 = vld [vmem:[%s3 + $0x28] sm:$0xff]
  %v362 = vld [vmem:[%s3 + $0x30] sm:$0xff]
  %v363 = vld [vmem:[%s3 + $0x38] sm:$0xff]
  %v364 = vld [vmem:[%s4] sm:$0x1]
  %v366 = vlaneseq
  %v367 = vshrl.u32 %v366, 7
  %v368 = vsub.s32 0, %v367
  %v369 = vrot.slane %v364, %v368
  %vm371 = vcmask 523264
  %v373 = vsel %vm371, %v331, 0
  %v376 = vsel %vm371, %v332, 0
  %v379 = vsel %vm371, %v333, 0
  %v382 = vsel %vm371, %v334, 0
  %v385 = vsel %vm371, %v335, 0
  %v388 = vsel %vm371, %v336, 0
  %v391 = vsel %vm371, %v337, 0
  %v394 = vsel %vm371, %v338, 0
  %v397 = vsel %vm371, %v339, 0
  %v400 = vsel %vm371, %v340, 0
  %v403 = vsel %vm371, %v341, 0
  %v406 = vsel %vm371, %v342, 0
  %v409 = vsel %vm371, %v343, 0
  %v412 = vsel %vm371, %v344, 0
  %v415 = vsel %vm371, %v345, 0
  %v418 = vsel %vm371, %v346, 0
  %v421 = vsel %vm371, %v347, 0
  %v424 = vsel %vm371, %v348, 0
  %v427 = vsel %vm371, %v349, 0
  %v430 = vsel %vm371, %v350, 0
  %v433 = vsel %vm371, %v351, 0
  %v436 = vsel %vm371, %v352, 0
  %v439 = vsel %vm371, %v353, 0
  %v442 = vsel %vm371, %v354, 0
  %v445 = vsel %vm371, %v355, 0
  %447 = vmatprep.subr.mxu0 0.0
  %448 = vmatpush1.msra.mxu0 %v356
  %449 = vmatprep.subr.mxu0 0.0
  %450 = vmatpush1.msra.mxu0 %v357
  %451 = vmatprep.subr.mxu0 0.0
  %452 = vmatpush1.msra.mxu0 %v358
  %453 = vmatprep.subr.mxu0 0.0
  %454 = vmatpush1.msra.mxu0 %v359
  %455 = vmatprep.subr.mxu0 0.0
  %456 = vmatpush1.msra.mxu0 %v360
  %457 = vmatprep.subr.mxu0 0.0
  %458 = vmatpush1.msra.mxu0 %v361
  %459 = vmatprep.subr.mxu0 0.0
  %460 = vmatpush1.msra.mxu0 %v362
  %461 = vmatprep.subr.mxu0 0.0
  %462 = vmatpush1.msra.mxu0 %v363
  %463 = vmatprep.subr.mxu0 0.0
  %464 = vmatpush1.msra.mxu0 0.0
  %465 = vmatprep.subr.mxu0 0.0
  %466 = vmatpush1.msra.mxu0 0.0
  %467 = vmatprep.subr.mxu0 0.0
  %468 = vmatpush1.msra.mxu0 0.0
  %469 = vmatprep.subr.mxu0 0.0
  %470 = vmatpush1.msra.mxu0 0.0
  %471 = vmatprep.subr.mxu0 0.0
  %472 = vmatpush1.msra.mxu0 0.0
  %473 = vmatprep.subr.mxu0 0.0
  %474 = vmatpush1.msra.mxu0 0.0
  %475 = vmatprep.subr.mxu0 0.0
  %476 = vmatpush1.msra.mxu0 0.0
  %477 = vmatprep.subr.mxu0 0.0
  %478 = vmatpush1.msra.mxu0 0.0
  %479 = vmatprep.subr.mxu0 0.0
  %480 = vmatpush1.msra.mxu0 0.0
  %481 = vmatprep.subr.mxu0 0.0
  %482 = vmatpush1.msra.mxu0 0.0
  %483 = vmatprep.subr.mxu0 0.0
  %484 = vmatpush1.msra.mxu0 0.0
  %485 = vmatprep.subr.mxu0 0.0
  %486 = vmatpush1.msra.mxu0 0.0
  %487 = vmatprep.subr.mxu0 0.0
  %488 = vmatpush1.msra.mxu0 0.0
  %489 = vmatprep.subr.mxu0 0.0
  %490 = vmatpush1.msra.mxu0 0.0
  %491 = vmatprep.subr.mxu0 0.0
  %492 = vmatpush1.msra.mxu0 0.0
  %493 = vmatprep.subr.mxu0 0.0
  %494 = vmatpush1.msra.mxu0 0.0
  %495 = vmatprep.subr.mxu0 0.0
  %496 = vmatpush1.msra.mxu0 0.0
  %497 = vmatprep.subr.mxu0 0.0
  %498 = vmatpush1.msra.mxu0 0.0
  %499 = vmatprep.subr.mxu0 0.0
  %500 = vmatpush1.msra.mxu0 0.0
  %501 = vmatprep.subr.mxu0 0.0
  %502 = vmatpush1.msra.mxu0 0.0
  %503 = vmatprep.subr.mxu0 0.0
  %504 = vmatpush1.msra.mxu0 0.0
  %505 = vmatprep.subr.mxu0 0.0
  %506 = vmatpush1.msra.mxu0 0.0
  %507 = vmatprep.subr.mxu0 0.0
  %508 = vmatpush1.msra.mxu0 0.0
  %509 = vmatprep.subr.mxu0 0.0
  %510 = vmatpush1.msra.mxu0 0.0
  %511 = vmatprep.mubr.f32.mxu0 0.0
  %512 = vmatmul.mubr.f32.gmra.mrb[0].mxu0 %v373
  %v513 = vpop.f32.mrb[0].mxu0
  %v514 = vadd.f32 %v369, %v513
  %v515 = vpop.f32.mrb[0].mxu0
  %516 = vmatprep.mubr.f32.mxu0 0.0
  %517 = vmatmul.mubr.f32.gmra.mrb[0].mxu0 %v376
  %v518 = vpop.f32.mrb[0].mxu0
  %v519 = vadd.f32 %v369, %v518
  %v520 = vpop.f32.mrb[0].mxu0
  %521 = vmatprep.mubr.f32.mxu0 0.0
  %522 = vmatmul.mubr.f32.gmra.mrb[0].mxu0 %v379
  %v523 = vpop.f32.mrb[0].mxu0
  %v524 = vadd.f32 %v369, %v523
  %v525 = vpop.f32.mrb[0].mxu0
  %526 = vmatprep.mubr.f32.mxu0 0.0
  %527 = vmatmul.mubr.f32.gmra.mrb[0].mxu0 %v382
  %v528 = vpop.f32.mrb[0].mxu0
  %v529 = vadd.f32 %v369, %v528
  %v530 = vpop.f32.mrb[0].mxu0
  %531 = vmatprep.mubr.f32.mxu0 0.0
  %532 = vmatmul.mubr.f32.gmra.mrb[0].mxu0 %v385
  %v533 = vpop.f32.mrb[0].mxu0
  %v534 = vadd.f32 %v369, %v533
  %v535 = vpop.f32.mrb[0].mxu0
  %536 = vmatprep.mubr.f32.mxu0 0.0
  %537 = vmatmul.mubr.f32.gmra.mrb[0].mxu0 %v388
  %v538 = vpop.f32.mrb[0].mxu0
  %v539 = vadd.f32 %v369, %v538
  %v540 = vpop.f32.mrb[0].mxu0
  %541 = vmatprep.mubr.f32.mxu0 0.0
  %542 = vmatmul.mubr.f32.gmra.mrb[0].mxu0 %v391
  %v543 = vpop.f32.mrb[0].mxu0
  %v544 = vadd.f32 %v369, %v543
  %v545 = vpop.f32.mrb[0].mxu0
  %546 = vmatprep.mubr.f32.mxu0 0.0
  %547 = vmatmul.mubr.f32.gmra.mrb[0].mxu0 %v394
  %v548 = vpop.f32.mrb[0].mxu0
  %v549 = vadd.f32 %v369, %v548
  %v550 = vpop.f32.mrb[0].mxu0
  %551 = vmatprep.mubr.f32.mxu0 0.0
  %552 = vmatmul.mubr.f32.gmra.mrb[0].mxu0 %v397
  %v553 = vpop.f32.mrb[0].mxu0
  %v554 = vadd.f32 %v369, %v553
  %v555 = vpop.f32.mrb[0].mxu0
  %556 = vmatprep.mubr.f32.mxu0 0.0
  %557 = vmatmul.mubr.f32.gmra.mrb[0].mxu0 %v400
  %v558 = vpop.f32.mrb[0].mxu0
  %v559 = vadd.f32 %v369, %v558
  %v560 = vpop.f32.mrb[0].mxu0
  %561 = vmatprep.mubr.f32.mxu0 0.0
  %562 = vmatmul.mubr.f32.gmra.mrb[0].mxu0 %v403
  %v563 = vpop.f32.mrb[0].mxu0
  %v564 = vadd.f32 %v369, %v563
  %v565 = vpop.f32.mrb[0].mxu0
  %566 = vmatprep.mubr.f32.mxu0 0.0
  %567 = vmatmul.mubr.f32.gmra.mrb[0].mxu0 %v406
  %v568 = vpop.f32.mrb[0].mxu0
  %v569 = vadd.f32 %v369, %v568
  %v570 = vpop.f32.mrb[0].mxu0
  %571 = vmatprep.mubr.f32.mxu0 0.0
  %572 = vmatmul.mubr.f32.gmra.mrb[0].mxu0 %v409
  %v573 = vpop.f32.mrb[0].mxu0
  %v574 = vadd.f32 %v369, %v573
  %v575 = vpop.f32.mrb[0].mxu0
  %576 = vmatprep.mubr.f32.mxu0 0.0
  %577 = vmatmul.mubr.f32.gmra.mrb[0].mxu0 %v412
  %v578 = vpop.f32.mrb[0].mxu0
  %v579 = vadd.f32 %v369, %v578
  %v580 = vpop.f32.mrb[0].mxu0
  %581 = vmatprep.mubr.f32.mxu0 0.0
  %582 = vmatmul.mubr.f32.gmra.mrb[0].mxu0 %v415
  %v583 = vpop.f32.mrb[0].mxu0
  %v584 = vadd.f32 %v369, %v583
  %v585 = vpop.f32.mrb[0].mxu0
  %586 = vmatprep.mubr.f32.mxu0 0.0
  %587 = vmatmul.mubr.f32.gmra.mrb[0].mxu0 %v418
  %v588 = vpop.f32.mrb[0].mxu0
  %v589 = vadd.f32 %v369, %v588
  %v590 = vpop.f32.mrb[0].mxu0
  %591 = vmatprep.mubr.f32.mxu0 0.0
  %592 = vmatmul.mubr.f32.gmra.mrb[0].mxu0 %v421
  %v593 = vpop.f32.mrb[0].mxu0
  %v594 = vadd.f32 %v369, %v593
  %v595 = vpop.f32.mrb[0].mxu0
  %596 = vmatprep.mubr.f32.mxu0 0.0
  %597 = vmatmul.mubr.f32.gmra.mrb[0].mxu0 %v424
  %v598 = vpop.f32.mrb[0].mxu0
  %v599 = vadd.f32 %v369, %v598
  %v600 = vpop.f32.mrb[0].mxu0
  %601 = vmatprep.mubr.f32.mxu0 0.0
  %602 = vmatmul.mubr.f32.gmra.mrb[0].mxu0 %v427
  %v603 = vpop.f32.mrb[0].mxu0
  %v604 = vadd.f32 %v369, %v603
  %v605 = vpop.f32.mrb[0].mxu0
  %606 = vmatprep.mubr.f32.mxu0 0.0
  %607 = vmatmul.mubr.f32.gmra.mrb[0].mxu0 %v430
  %v608 = vpop.f32.mrb[0].mxu0
  %v609 = vadd.f32 %v369, %v608
  %v610 = vpop.f32.mrb[0].mxu0
  %611 = vmatprep.mubr.f32.mxu0 0.0
  %612 = vmatmul.mubr.f32.gmra.mrb[0].mxu0 %v433
  %v613 = vpop.f32.mrb[0].mxu0
  %v614 = vadd.f32 %v369, %v613
  %v615 = vpop.f32.mrb[0].mxu0
  %616 = vmatprep.mubr.f32.mxu0 0.0
  %617 = vmatmul.mubr.f32.gmra.mrb[0].mxu0 %v436
  %v618 = vpop.f32.mrb[0].mxu0
  %v619 = vadd.f32 %v369, %v618
  %v620 = vpop.f32.mrb[0].mxu0
  %621 = vmatprep.mubr.f32.mxu0 0.0
  %622 = vmatmul.mubr.f32.gmra.mrb[0].mxu0 %v439
  %v623 = vpop.f32.mrb[0].mxu0
  %v624 = vadd.f32 %v369, %v623
  %v625 = vpop.f32.mrb[0].mxu0
  %626 = vmatprep.mubr.f32.mxu0 0.0
  %627 = vmatmul.mubr.f32.gmra.mrb[0].mxu0 %v442
  %v628 = vpop.f32.mrb[0].mxu0
  %v629 = vadd.f32 %v369, %v628
  %v630 = vpop.f32.mrb[0].mxu0
  %631 = vmatprep.mubr.f32.mxu0 0.0
  %632 = vmatmul.mubr.f32.gmra.mrb[0].mxu0 %v445
  %v633 = vpop.f32.mrb[0].mxu0
  %v634 = vadd.f32 %v369, %v633
  %v635 = vpop.f32.mrb[0].mxu0
  %636 = vdwg.mxu0
  %v637 = vmax.f32 %v514, 0.0
  %v638 = vmax.f32 %v519, 0.0
  %v639 = vmax.f32 %v524, 0.0
  %v640 = vmax.f32 %v529, 0.0
  %v641 = vmax.f32 %v534, 0.0
  %v642 = vmax.f32 %v539, 0.0
  %v643 = vmax.f32 %v544, 0.0
  %v644 = vmax.f32 %v549, 0.0
  %v645 = vmax.f32 %v554, 0.0
  %v646 = vmax.f32 %v559, 0.0
  %v647 = vmax.f32 %v564, 0.0
  %v648 = vmax.f32 %v569, 0.0
  %v649 = vmax.f32 %v574, 0.0
  %v650 = vmax.f32 %v579, 0.0
  %v651 = vmax.f32 %v584, 0.0
  %v652 = vmax.f32 %v589, 0.0
  %v653 = vmax.f32 %v594, 0.0
  %v654 = vmax.f32 %v599, 0.0
  %v655 = vmax.f32 %v604, 0.0
  %v656 = vmax.f32 %v609, 0.0
  %v657 = vmax.f32 %v614, 0.0
  %v658 = vmax.f32 %v619, 0.0
  %v659 = vmax.f32 %v624, 0.0
  %v660 = vmax.f32 %v629, 0.0
  %v661 = vmax.f32 %v634, 0.0
  %v662 = vld [vmem:[%s5] sm:$0xff]
  %v663 = vld [vmem:[%s5 + $0x8] sm:$0xff]
  %v664 = vld [vmem:[%s5 + $0x10] sm:$0xff]
  %v665 = vld [vmem:[%s5 + $0x18] sm:$0xff]
  %v666 = vld [vmem:[%s5 + $0x20] sm:$0xff]
  %v667 = vld [vmem:[%s5 + $0x28] sm:$0xff]
  %v668 = vld [vmem:[%s5 + $0x30] sm:$0xff]
  %v669 = vld [vmem:[%s5 + $0x38] sm:$0xff]
  %v670 = vld [vmem:[%s6] sm:$0x1]
  %v672 = vlaneseq
  %v673 = vshrl.u32 %v672, 7
  %v674 = vsub.s32 0, %v673
  %v675 = vrot.slane %v670, %v674
  %v678 = vsel %vm371, %v637, 0
  %v681 = vsel %vm371, %v638, 0
  %v684 = vsel %vm371, %v639, 0
  %v687 = vsel %vm371, %v640, 0
  %v690 = vsel %vm371, %v641, 0
  %v693 = vsel %vm371, %v642, 0
  %v696 = vsel %vm371, %v643, 0
  %v699 = vsel %vm371, %v644, 0
  %v702 = vsel %vm371, %v645, 0
  %v705 = vsel %vm371, %v646, 0
  %v708 = vsel %vm371, %v647, 0
  %v711 = vsel %vm371, %v648, 0
  %v714 = vsel %vm371, %v649, 0
  %v717 = vsel %vm371, %v650, 0
  %v720 = vsel %vm371, %v651, 0
  %v723 = vsel %vm371, %v652, 0
  %v726 = vsel %vm371, %v653, 0
  %v729 = vsel %vm371, %v654, 0
  %v732 = vsel %vm371, %v655, 0
  %v735 = vsel %vm371, %v656, 0
  %v738 = vsel %vm371, %v657, 0
  %v741 = vsel %vm371, %v658, 0
  %v744 = vsel %vm371, %v659, 0
  %v747 = vsel %vm371, %v660, 0
  %v750 = vsel %vm371, %v661, 0
  %752 = vmatprep.subr.mxu0 0.0
  %753 = vmatpush1.msra.mxu0 %v662
  %754 = vmatprep.subr.mxu0 0.0
  %755 = vmatpush1.msra.mxu0 %v663
  %756 = vmatprep.subr.mxu0 0.0
  %757 = vmatpush1.msra.mxu0 %v664
  %758 = vmatprep.subr.mxu0 0.0
  %759 = vmatpush1.msra.mxu0 %v665
  %760 = vmatprep.subr.mxu0 0.0
  %761 = vmatpush1.msra.mxu0 %v666
  %762 = vmatprep.subr.mxu0 0.0
  %763 = vmatpush1.msra.mxu0 %v667
  %764 = vmatprep.subr.mxu0 0.0
  %765 = vmatpush1.msra.mxu0 %v668
  %766 = vmatprep.subr.mxu0 0.0
  %767 = vmatpush1.msra.mxu0 %v669
  %768 = vmatprep.subr.mxu0 0.0
  %769 = vmatpush1.msra.mxu0 0.0
  %770 = vmatprep.subr.mxu0 0.0
  %771 = vmatpush1.msra.mxu0 0.0
  %772 = vmatprep.subr.mxu0 0.0
  %773 = vmatpush1.msra.mxu0 0.0
  %774 = vmatprep.subr.mxu0 0.0
  %775 = vmatpush1.msra.mxu0 0.0
  %776 = vmatprep.subr.mxu0 0.0
  %777 = vmatpush1.msra.mxu0 0.0
  %778 = vmatprep.subr.mxu0 0.0
  %779 = vmatpush1.msra.mxu0 0.0
  %780 = vmatprep.subr.mxu0 0.0
  %781 = vmatpush1.msra.mxu0 0.0
  %782 = vmatprep.subr.mxu0 0.0
  %783 = vmatpush1.msra.mxu0 0.0
  %784 = vmatprep.subr.mxu0 0.0
  %785 = vmatpush1.msra.mxu0 0.0
  %786 = vmatprep.subr.mxu0 0.0
  %787 = vmatpush1.msra.mxu0 0.0
  %788 = vmatprep.subr.mxu0 0.0
  %789 = vmatpush1.msra.mxu0 0.0
  %790 = vmatprep.subr.mxu0 0.0
  %791 = vmatpush1.msra.mxu0 0.0
  %792 = vmatprep.subr.mxu0 0.0
  %793 = vmatpush1.msra.mxu0 0.0
  %794 = vmatprep.subr.mxu0 0.0
  %795 = vmatpush1.msra.mxu0 0.0
  %796 = vmatprep.subr.mxu0 0.0
  %797 = vmatpush1.msra.mxu0 0.0
  %798 = vmatprep.subr.mxu0 0.0
  %799 = vmatpush1.msra.mxu0 0.0
  %800 = vmatprep.subr.mxu0 0.0
  %801 = vmatpush1.msra.mxu0 0.0
  %802 = vmatprep.subr.mxu0 0.0
  %803 = vmatpush1.msra.mxu0 0.0
  %804 = vmatprep.subr.mxu0 0.0
  %805 = vmatpush1.msra.mxu0 0.0
  %806 = vmatprep.subr.mxu0 0.0
  %807 = vmatpush1.msra.mxu0 0.0
  %808 = vmatprep.subr.mxu0 0.0
  %809 = vmatpush1.msra.mxu0 0.0
  %810 = vmatprep.subr.mxu0 0.0
  %811 = vmatpush1.msra.mxu0 0.0
  %812 = vmatprep.subr.mxu0 0.0
  %813 = vmatpush1.msra.mxu0 0.0
  %814 = vmatprep.subr.mxu0 0.0
  %815 = vmatpush1.msra.mxu0 0.0
  %816 = vmatprep.mubr.f32.mxu0 0.0
  %817 = vmatmul.mubr.f32.gmra.mrb[0].mxu0 %v678
  %v818 = vpop.f32.mrb[0].mxu0
  %v819 = vadd.f32 %v675, %v818
  %v820 = vpop.f32.mrb[0].mxu0
  %821 = vmatprep.mubr.f32.mxu0 0.0
  %822 = vmatmul.mubr.f32.gmra.mrb[0].mxu0 %v681
  %v823 = vpop.f32.mrb[0].mxu0
  %v824 = vadd.f32 %v675, %v823
  %v825 = vpop.f32.mrb[0].mxu0
  %826 = vmatprep.mubr.f32.mxu0 0.0
  %827 = vmatmul.mubr.f32.gmra.mrb[0].mxu0 %v684
  %v828 = vpop.f32.mrb[0].mxu0
  %v829 = vadd.f32 %v675, %v828
  %v830 = vpop.f32.mrb[0].mxu0
  %831 = vmatprep.mubr.f32.mxu0 0.0
  %832 = vmatmul.mubr.f32.gmra.mrb[0].mxu0 %v687
  %v833 = vpop.f32.mrb[0].mxu0
  %v834 = vadd.f32 %v675, %v833
  %v835 = vpop.f32.mrb[0].mxu0
  %836 = vmatprep.mubr.f32.mxu0 0.0
  %837 = vmatmul.mubr.f32.gmra.mrb[0].mxu0 %v690
  %v838 = vpop.f32.mrb[0].mxu0
  %v839 = vadd.f32 %v675, %v838
  %v840 = vpop.f32.mrb[0].mxu0
  %841 = vmatprep.mubr.f32.mxu0 0.0
  %842 = vmatmul.mubr.f32.gmra.mrb[0].mxu0 %v693
  %v843 = vpop.f32.mrb[0].mxu0
  %v844 = vadd.f32 %v675, %v843
  %v845 = vpop.f32.mrb[0].mxu0
  %846 = vmatprep.mubr.f32.mxu0 0.0
  %847 = vmatmul.mubr.f32.gmra.mrb[0].mxu0 %v696
  %v848 = vpop.f32.mrb[0].mxu0
  %v849 = vadd.f32 %v675, %v848
  %v850 = vpop.f32.mrb[0].mxu0
  %851 = vmatprep.mubr.f32.mxu0 0.0
  %852 = vmatmul.mubr.f32.gmra.mrb[0].mxu0 %v699
  %v853 = vpop.f32.mrb[0].mxu0
  %v854 = vadd.f32 %v675, %v853
  %v855 = vpop.f32.mrb[0].mxu0
  %856 = vmatprep.mubr.f32.mxu0 0.0
  %857 = vmatmul.mubr.f32.gmra.mrb[0].mxu0 %v702
  %v858 = vpop.f32.mrb[0].mxu0
  %v859 = vadd.f32 %v675, %v858
  %v860 = vpop.f32.mrb[0].mxu0
  %861 = vmatprep.mubr.f32.mxu0 0.0
  %862 = vmatmul.mubr.f32.gmra.mrb[0].mxu0 %v705
  %v863 = vpop.f32.mrb[0].mxu0
  %v864 = vadd.f32 %v675, %v863
  %v865 = vpop.f32.mrb[0].mxu0
  %866 = vmatprep.mubr.f32.mxu0 0.0
  %867 = vmatmul.mubr.f32.gmra.mrb[0].mxu0 %v708
  %v868 = vpop.f32.mrb[0].mxu0
  %v869 = vadd.f32 %v675, %v868
  %v870 = vpop.f32.mrb[0].mxu0
  %871 = vmatprep.mubr.f32.mxu0 0.0
  %872 = vmatmul.mubr.f32.gmra.mrb[0].mxu0 %v711
  %v873 = vpop.f32.mrb[0].mxu0
  %v874 = vadd.f32 %v675, %v873
  %v875 = vpop.f32.mrb[0].mxu0
  %876 = vmatprep.mubr.f32.mxu0 0.0
  %877 = vmatmul.mubr.f32.gmra.mrb[0].mxu0 %v714
  %v878 = vpop.f32.mrb[0].mxu0
  %v879 = vadd.f32 %v675, %v878
  %v880 = vpop.f32.mrb[0].mxu0
  %881 = vmatprep.mubr.f32.mxu0 0.0
  %882 = vmatmul.mubr.f32.gmra.mrb[0].mxu0 %v717
  %v883 = vpop.f32.mrb[0].mxu0
  %v884 = vadd.f32 %v675, %v883
  %v885 = vpop.f32.mrb[0].mxu0
  %886 = vmatprep.mubr.f32.mxu0 0.0
  %887 = vmatmul.mubr.f32.gmra.mrb[0].mxu0 %v720
  %v888 = vpop.f32.mrb[0].mxu0
  %v889 = vadd.f32 %v675, %v888
  %v890 = vpop.f32.mrb[0].mxu0
  %891 = vmatprep.mubr.f32.mxu0 0.0
  %892 = vmatmul.mubr.f32.gmra.mrb[0].mxu0 %v723
  %v893 = vpop.f32.mrb[0].mxu0
  %v894 = vadd.f32 %v675, %v893
  %v895 = vpop.f32.mrb[0].mxu0
  %896 = vmatprep.mubr.f32.mxu0 0.0
  %897 = vmatmul.mubr.f32.gmra.mrb[0].mxu0 %v726
  %v898 = vpop.f32.mrb[0].mxu0
  %v899 = vadd.f32 %v675, %v898
  %v900 = vpop.f32.mrb[0].mxu0
  %901 = vmatprep.mubr.f32.mxu0 0.0
  %902 = vmatmul.mubr.f32.gmra.mrb[0].mxu0 %v729
  %v903 = vpop.f32.mrb[0].mxu0
  %v904 = vadd.f32 %v675, %v903
  %v905 = vpop.f32.mrb[0].mxu0
  %906 = vmatprep.mubr.f32.mxu0 0.0
  %907 = vmatmul.mubr.f32.gmra.mrb[0].mxu0 %v732
  %v908 = vpop.f32.mrb[0].mxu0
  %v909 = vadd.f32 %v675, %v908
  %v910 = vpop.f32.mrb[0].mxu0
  %911 = vmatprep.mubr.f32.mxu0 0.0
  %912 = vmatmul.mubr.f32.gmra.mrb[0].mxu0 %v735
  %v913 = vpop.f32.mrb[0].mxu0
  %v914 = vadd.f32 %v675, %v913
  %v915 = vpop.f32.mrb[0].mxu0
  %916 = vmatprep.mubr.f32.mxu0 0.0
  %917 = vmatmul.mubr.f32.gmra.mrb[0].mxu0 %v738
  %v918 = vpop.f32.mrb[0].mxu0
  %v919 = vadd.f32 %v675, %v918
  %v920 = vpop.f32.mrb[0].mxu0
  %921 = vmatprep.mubr.f32.mxu0 0.0
  %922 = vmatmul.mubr.f32.gmra.mrb[0].mxu0 %v741
  %v923 = vpop.f32.mrb[0].mxu0
  %v924 = vadd.f32 %v675, %v923
  %v925 = vpop.f32.mrb[0].mxu0
  %926 = vmatprep.mubr.f32.mxu0 0.0
  %927 = vmatmul.mubr.f32.gmra.mrb[0].mxu0 %v744
  %v928 = vpop.f32.mrb[0].mxu0
  %v929 = vadd.f32 %v675, %v928
  %v930 = vpop.f32.mrb[0].mxu0
  %931 = vmatprep.mubr.f32.mxu0 0.0
  %932 = vmatmul.mubr.f32.gmra.mrb[0].mxu0 %v747
  %v933 = vpop.f32.mrb[0].mxu0
  %v934 = vadd.f32 %v675, %v933
  %v935 = vpop.f32.mrb[0].mxu0
  %936 = vmatprep.mubr.f32.mxu0 0.0
  %937 = vmatmul.mubr.f32.gmra.mrb[0].mxu0 %v750
  %v938 = vpop.f32.mrb[0].mxu0
  %v939 = vadd.f32 %v675, %v938
  %v940 = vpop.f32.mrb[0].mxu0
  %941 = vdwg.mxu0
  %v942 = vld [vmem:[%s7] sm:$0xff]
  %v943 = vld [vmem:[%s7 + $0x8] sm:$0xff]
  %v944 = vld [vmem:[%s7 + $0x10] sm:$0xff]
  %v945 = vld [vmem:[%s7 + $0x18] sm:$0xff]
  %v946 = vld [vmem:[%s7 + $0x20] sm:$0xff]
  %v947 = vld [vmem:[%s7 + $0x28] sm:$0xff]
  %v948 = vld [vmem:[%s7 + $0x30] sm:$0xff]
  %v949 = vld [vmem:[%s7 + $0x38] sm:$0xff]
  %v950 = vld [vmem:[%s7 + $0x40] sm:$0xff]
  %v951 = vld [vmem:[%s7 + $0x48] sm:$0xff]
  %v952 = vld [vmem:[%s7 + $0x50] sm:$0xff]
  %v953 = vld [vmem:[%s7 + $0x58] sm:$0xff]
  %v954 = vld [vmem:[%s7 + $0x60] sm:$0xff]
  %v955 = vld [vmem:[%s7 + $0x68] sm:$0xff]
  %v956 = vld [vmem:[%s7 + $0x70] sm:$0xff]
  %v957 = vld [vmem:[%s7 + $0x78] sm:$0xff]
  %v958 = vld [vmem:[%s7 + $0x80] sm:$0xff]
  %v959 = vld [vmem:[%s7 + $0x88] sm:$0xff]
  %v960 = vld [vmem:[%s7 + $0x90] sm:$0xff]
  %v961 = vld [vmem:[%s7 + $0x98] sm:$0xff]
  %v962 = vld [vmem:[%s7 + $0xa0] sm:$0xff]
  %v963 = vld [vmem:[%s7 + $0xa8] sm:$0xff]
  %v964 = vld [vmem:[%s7 + $0xb0] sm:$0xff]
  %v965 = vld [vmem:[%s7 + $0xb8] sm:$0xff]
  %v966 = vld [vmem:[%s7 + $0xc0] sm:$0xff]
  %v967 = vmul.f32 %v819, 1.442695
  %v968 = vpow.pop %v967
  %v969 = vmul.f32 %v824, 1.442695
  %v970 = vpow.pop %v969
  %v971 = vmul.f32 %v829, 1.442695
  %v972 = vpow.pop %v971
  %v973 = vmul.f32 %v834, 1.442695
  %v974 = vpow.pop %v973
  %v975 = vmul.f32 %v839, 1.442695
  %v976 = vpow.pop %v975
  %v977 = vmul.f32 %v844, 1.442695
  %v978 = vpow.pop %v977
  %v979 = vmul.f32 %v849, 1.442695
  %v980 = vpow.pop %v979
  %v981 = vmul.f32 %v854, 1.442695
  %v982 = vpow.pop %v981
  %v983 = vmul.f32 %v859, 1.442695
  %v984 = vpow.pop %v983
  %v985 = vmul.f32 %v864, 1.442695
  %v986 = vpow.pop %v985
  %v987 = vmul.f32 %v869, 1.442695
  %v988 = vpow.pop %v987
  %v989 = vmul.f32 %v874, 1.442695
  %v990 = vpow.pop %v989
  %v991 = vmul.f32 %v879, 1.442695
  %v992 = vpow.pop %v991
  %v993 = vmul.f32 %v884, 1.442695
  %v994 = vpow.pop %v993
  %v995 = vmul.f32 %v889, 1.442695
  %v996 = vpow.pop %v995
  %v997 = vmul.f32 %v894, 1.442695
  %v998 = vpow.pop %v997
  %v999 = vmul.f32 %v899, 1.442695
  %v1000 = vpow.pop %v999
  %v1001 = vmul.f32 %v904, 1.442695
  %v1002 = vpow.pop %v1001
  %v1003 = vmul.f32 %v909, 1.442695
  %v1004 = vpow.pop %v1003
  %v1005 = vmul.f32 %v914, 1.442695
  %v1006 = vpow.pop %v1005
  %v1007 = vmul.f32 %v919, 1.442695
  %v1008 = vpow.pop %v1007
  %v1009 = vmul.f32 %v924, 1.442695
  %v1010 = vpow.pop %v1009
  %v1011 = vmul.f32 %v929, 1.442695
  %v1012 = vpow.pop %v1011
  %v1013 = vmul.f32 %v934, 1.442695
  %v1014 = vpow.pop %v1013
  %v1015 = vmul.f32 %v939, 1.442695
  %v1016 = vpow.pop %v1015
  %1042 = vrot.lane.b32.xlu0 %v942, 8
  %v1043 = vpop.permute.xlu0 %1042
  %1044 = vrot.lane.b32.xlu0 %v943, 8
  %v1045 = vpop.permute.xlu0 %1044
  %1046 = vrot.lane.b32.xlu0 %v944, 8
  %v1047 = vpop.permute.xlu0 %1046
  %1048 = vrot.lane.b32.xlu0 %v945, 8
  %v1049 = vpop.permute.xlu0 %1048
  %1050 = vrot.lane.b32.xlu0 %v946, 8
  %v1051 = vpop.permute.xlu0 %1050
  %1052 = vrot.lane.b32.xlu0 %v947, 8
  %v1053 = vpop.permute.xlu0 %1052
  %1054 = vrot.lane.b32.xlu0 %v948, 8
  %v1055 = vpop.permute.xlu0 %1054
  %1056 = vrot.lane.b32.xlu0 %v949, 8
  %v1057 = vpop.permute.xlu0 %1056
  %1058 = vrot.lane.b32.xlu0 %v950, 8
  %v1059 = vpop.permute.xlu0 %1058
  %1060 = vrot.lane.b32.xlu0 %v951, 8
  %v1061 = vpop.permute.xlu0 %1060
  %1062 = vrot.lane.b32.xlu0 %v952, 8
  %v1063 = vpop.permute.xlu0 %1062
  %1064 = vrot.lane.b32.xlu0 %v953, 8
  %v1065 = vpop.permute.xlu0 %1064
  %1066 = vrot.lane.b32.xlu0 %v954, 8
  %v1067 = vpop.permute.xlu0 %1066
  %1068 = vrot.lane.b32.xlu0 %v955, 8
  %v1069 = vpop.permute.xlu0 %1068
  %1070 = vrot.lane.b32.xlu0 %v956, 8
  %v1071 = vpop.permute.xlu0 %1070
  %1072 = vrot.lane.b32.xlu0 %v957, 8
  %v1073 = vpop.permute.xlu0 %1072
  %1074 = vrot.lane.b32.xlu0 %v958, 8
  %v1075 = vpop.permute.xlu0 %1074
  %1076 = vrot.lane.b32.xlu0 %v959, 8
  %v1077 = vpop.permute.xlu0 %1076
  %1078 = vrot.lane.b32.xlu0 %v960, 8
  %v1079 = vpop.permute.xlu0 %1078
  %1080 = vrot.lane.b32.xlu0 %v961, 8
  %v1081 = vpop.permute.xlu0 %1080
  %1082 = vrot.lane.b32.xlu0 %v962, 8
  %v1083 = vpop.permute.xlu0 %1082
  %1084 = vrot.lane.b32.xlu0 %v963, 8
  %v1085 = vpop.permute.xlu0 %1084
  %1086 = vrot.lane.b32.xlu0 %v964, 8
  %v1087 = vpop.permute.xlu0 %1086
  %1088 = vrot.lane.b32.xlu0 %v965, 8
  %v1089 = vpop.permute.xlu0 %1088
  %1090 = vrot.lane.b32.xlu0 %v966, 8
  %v1091 = vpop.permute.xlu0 %1090
  %v1117 = vmul.f32 %v968, %v1043
  %v1118 = vmul.f32 %v970, %v1045
  %v1119 = vmul.f32 %v972, %v1047
  %v1120 = vmul.f32 %v974, %v1049
  %v1121 = vmul.f32 %v976, %v1051
  %v1122 = vmul.f32 %v978, %v1053
  %v1123 = vmul.f32 %v980, %v1055
  %v1124 = vmul.f32 %v982, %v1057
  %v1125 = vmul.f32 %v984, %v1059
  %v1126 = vmul.f32 %v986, %v1061
  %v1127 = vmul.f32 %v988, %v1063
  %v1128 = vmul.f32 %v990, %v1065
  %v1129 = vmul.f32 %v992, %v1067
  %v1130 = vmul.f32 %v994, %v1069
  %v1131 = vmul.f32 %v996, %v1071
  %v1132 = vmul.f32 %v998, %v1073
  %v1133 = vmul.f32 %v1000, %v1075
  %v1134 = vmul.f32 %v1002, %v1077
  %v1135 = vmul.f32 %v1004, %v1079
  %v1136 = vmul.f32 %v1006, %v1081
  %v1137 = vmul.f32 %v1008, %v1083
  %v1138 = vmul.f32 %v1010, %v1085
  %v1139 = vmul.f32 %v1012, %v1087
  %v1140 = vmul.f32 %v1014, %v1089
  %v1141 = vmul.f32 %v1016, %v1091
  %1167 = vrot.lane.b32.xlu0 %v1117, 120
  %v1168 = vpop.permute.xlu0 %1167
  %1169 = vrot.lane.b32.xlu0 %v1118, 120
  %v1170 = vpop.permute.xlu0 %1169
  %1171 = vrot.lane.b32.xlu0 %v1119, 120
  %v1172 = vpop.permute.xlu0 %1171
  %1173 = vrot.lane.b32.xlu0 %v1120, 120
  %v1174 = vpop.permute.xlu0 %1173
  %1175 = vrot.lane.b32.xlu0 %v1121, 120
  %v1176 = vpop.permute.xlu0 %1175
  %1177 = vrot.lane.b32.xlu0 %v1122, 120
  %v1178 = vpop.permute.xlu0 %1177
  %1179 = vrot.lane.b32.xlu0 %v1123, 120
  %v1180 = vpop.permute.xlu0 %1179
  %1181 = vrot.lane.b32.xlu0 %v1124, 120
  %v1182 = vpop.permute.xlu0 %1181
  %1183 = vrot.lane.b32.xlu0 %v1125, 120
  %v1184 = vpop.permute.xlu0 %1183
  %1185 = vrot.lane.b32.xlu0 %v1126, 120
  %v1186 = vpop.permute.xlu0 %1185
  %1187 = vrot.lane.b32.xlu0 %v1127, 120
  %v1188 = vpop.permute.xlu0 %1187
  %1189 = vrot.lane.b32.xlu0 %v1128, 120
  %v1190 = vpop.permute.xlu0 %1189
  %1191 = vrot.lane.b32.xlu0 %v1129, 120
  %v1192 = vpop.permute.xlu0 %1191
  %1193 = vrot.lane.b32.xlu0 %v1130, 120
  %v1194 = vpop.permute.xlu0 %1193
  %1195 = vrot.lane.b32.xlu0 %v1131, 120
  %v1196 = vpop.permute.xlu0 %1195
  %1197 = vrot.lane.b32.xlu0 %v1132, 120
  %v1198 = vpop.permute.xlu0 %1197
  %1199 = vrot.lane.b32.xlu0 %v1133, 120
  %v1200 = vpop.permute.xlu0 %1199
  %1201 = vrot.lane.b32.xlu0 %v1134, 120
  %v1202 = vpop.permute.xlu0 %1201
  %1203 = vrot.lane.b32.xlu0 %v1135, 120
  %v1204 = vpop.permute.xlu0 %1203
  %1205 = vrot.lane.b32.xlu0 %v1136, 120
  %v1206 = vpop.permute.xlu0 %1205
  %1207 = vrot.lane.b32.xlu0 %v1137, 120
  %v1208 = vpop.permute.xlu0 %1207
  %1209 = vrot.lane.b32.xlu0 %v1138, 120
  %v1210 = vpop.permute.xlu0 %1209
  %1211 = vrot.lane.b32.xlu0 %v1139, 120
  %v1212 = vpop.permute.xlu0 %1211
  %1213 = vrot.lane.b32.xlu0 %v1140, 120
  %v1214 = vpop.permute.xlu0 %1213
  %1215 = vrot.lane.b32.xlu0 %v1141, 120
  %v1216 = vpop.permute.xlu0 %1215
  %v1242 = vadd.f32 %v819, %v1168
  %v1243 = vadd.f32 %v824, %v1170
  %v1244 = vadd.f32 %v829, %v1172
  %v1245 = vadd.f32 %v834, %v1174
  %v1246 = vadd.f32 %v839, %v1176
  %v1247 = vadd.f32 %v844, %v1178
  %v1248 = vadd.f32 %v849, %v1180
  %v1249 = vadd.f32 %v854, %v1182
  %v1250 = vadd.f32 %v859, %v1184
  %v1251 = vadd.f32 %v864, %v1186
  %v1252 = vadd.f32 %v869, %v1188
  %v1253 = vadd.f32 %v874, %v1190
  %v1254 = vadd.f32 %v879, %v1192
  %v1255 = vadd.f32 %v884, %v1194
  %v1256 = vadd.f32 %v889, %v1196
  %v1257 = vadd.f32 %v894, %v1198
  %v1258 = vadd.f32 %v899, %v1200
  %v1259 = vadd.f32 %v904, %v1202
  %v1260 = vadd.f32 %v909, %v1204
  %v1261 = vadd.f32 %v914, %v1206
  %v1262 = vadd.f32 %v919, %v1208
  %v1263 = vadd.f32 %v924, %v1210
  %v1264 = vadd.f32 %v929, %v1212
  %v1265 = vadd.f32 %v934, %v1214
  %v1266 = vadd.f32 %v939, %v1216
  %v1267 = vtanh.pop %v1242
  %v1268 = vtanh.pop %v1243
  %v1269 = vtanh.pop %v1244
  %v1270 = vtanh.pop %v1245
  %v1271 = vtanh.pop %v1246
  %v1272 = vtanh.pop %v1247
  %v1273 = vtanh.pop %v1248
  %v1274 = vtanh.pop %v1249
  %v1275 = vtanh.pop %v1250
  %v1276 = vtanh.pop %v1251
  %v1277 = vtanh.pop %v1252
  %v1278 = vtanh.pop %v1253
  %v1279 = vtanh.pop %v1254
  %v1280 = vtanh.pop %v1255
  %v1281 = vtanh.pop %v1256
  %v1282 = vtanh.pop %v1257
  %v1283 = vtanh.pop %v1258
  %v1284 = vtanh.pop %v1259
  %v1285 = vtanh.pop %v1260
  %v1286 = vtanh.pop %v1261
  %v1287 = vtanh.pop %v1262
  %v1288 = vtanh.pop %v1263
  %v1289 = vtanh.pop %v1264
  %v1290 = vtanh.pop %v1265
  %v1291 = vtanh.pop %v1266
  %v1292 = vtanh.pop %v819
  %v1293 = vtanh.pop %v824
  %v1294 = vtanh.pop %v829
  %v1295 = vtanh.pop %v834
  %v1296 = vtanh.pop %v839
  %v1297 = vtanh.pop %v844
  %v1298 = vtanh.pop %v849
  %v1299 = vtanh.pop %v854
  %v1300 = vtanh.pop %v859
  %v1301 = vtanh.pop %v864
  %v1302 = vtanh.pop %v869
  %v1303 = vtanh.pop %v874
  %v1304 = vtanh.pop %v879
  %v1305 = vtanh.pop %v884
  %v1306 = vtanh.pop %v889
  %v1307 = vtanh.pop %v894
  %v1308 = vtanh.pop %v899
  %v1309 = vtanh.pop %v904
  %v1310 = vtanh.pop %v909
  %v1311 = vtanh.pop %v914
  %v1312 = vtanh.pop %v919
  %v1313 = vtanh.pop %v924
  %v1314 = vtanh.pop %v929
  %v1315 = vtanh.pop %v934
  %v1316 = vtanh.pop %v939
  %v1317 = vmul.f32 %v942, 0.5
  %v1318 = vmul.f32 %v943, 0.5
  %v1319 = vmul.f32 %v944, 0.5
  %v1320 = vmul.f32 %v945, 0.5
  %v1321 = vmul.f32 %v946, 0.5
  %v1322 = vmul.f32 %v947, 0.5
  %v1323 = vmul.f32 %v948, 0.5
  %v1324 = vmul.f32 %v949, 0.5
  %v1325 = vmul.f32 %v950, 0.5
  %v1326 = vmul.f32 %v951, 0.5
  %v1327 = vmul.f32 %v952, 0.5
  %v1328 = vmul.f32 %v953, 0.5
  %v1329 = vmul.f32 %v954, 0.5
  %v1330 = vmul.f32 %v955, 0.5
  %v1331 = vmul.f32 %v956, 0.5
  %v1332 = vmul.f32 %v957, 0.5
  %v1333 = vmul.f32 %v958, 0.5
  %v1334 = vmul.f32 %v959, 0.5
  %v1335 = vmul.f32 %v960, 0.5
  %v1336 = vmul.f32 %v961, 0.5
  %v1337 = vmul.f32 %v962, 0.5
  %v1338 = vmul.f32 %v963, 0.5
  %v1339 = vmul.f32 %v964, 0.5
  %v1340 = vmul.f32 %v965, 0.5
  %v1341 = vmul.f32 %v966, 0.5
  %v1342 = vmul.f32 %v1317, %v942
  %v1343 = vmul.f32 %v1318, %v943
  %v1344 = vmul.f32 %v1319, %v944
  %v1345 = vmul.f32 %v1320, %v945
  %v1346 = vmul.f32 %v1321, %v946
  %v1347 = vmul.f32 %v1322, %v947
  %v1348 = vmul.f32 %v1323, %v948
  %v1349 = vmul.f32 %v1324, %v949
  %v1350 = vmul.f32 %v1325, %v950
  %v1351 = vmul.f32 %v1326, %v951
  %v1352 = vmul.f32 %v1327, %v952
  %v1353 = vmul.f32 %v1328, %v953
  %v1354 = vmul.f32 %v1329, %v954
  %v1355 = vmul.f32 %v1330, %v955
  %v1356 = vmul.f32 %v1331, %v956
  %v1357 = vmul.f32 %v1332, %v957
  %v1358 = vmul.f32 %v1333, %v958
  %v1359 = vmul.f32 %v1334, %v959
  %v1360 = vmul.f32 %v1335, %v960
  %v1361 = vmul.f32 %v1336, %v961
  %v1362 = vmul.f32 %v1337, %v962
  %v1363 = vmul.f32 %v1338, %v963
  %v1364 = vmul.f32 %v1339, %v964
  %v1365 = vmul.f32 %v1340, %v965
  %v1366 = vmul.f32 %v1341, %v966
  %1392 = vrot.lane.b32.xlu0 %v1342, 8
  %v1393 = vpop.permute.xlu0 %1392
  %1394 = vrot.lane.b32.xlu0 %v1343, 8
  %v1395 = vpop.permute.xlu0 %1394
  %1396 = vrot.lane.b32.xlu0 %v1344, 8
  %v1397 = vpop.permute.xlu0 %1396
  %1398 = vrot.lane.b32.xlu0 %v1345, 8
  %v1399 = vpop.permute.xlu0 %1398
  %1400 = vrot.lane.b32.xlu0 %v1346, 8
  %v1401 = vpop.permute.xlu0 %1400
  %1402 = vrot.lane.b32.xlu0 %v1347, 8
  %v1403 = vpop.permute.xlu0 %1402
  %1404 = vrot.lane.b32.xlu0 %v1348, 8
  %v1405 = vpop.permute.xlu0 %1404
  %1406 = vrot.lane.b32.xlu0 %v1349, 8
  %v1407 = vpop.permute.xlu0 %1406
  %1408 = vrot.lane.b32.xlu0 %v1350, 8
  %v1409 = vpop.permute.xlu0 %1408
  %1410 = vrot.lane.b32.xlu0 %v1351, 8
  %v1411 = vpop.permute.xlu0 %1410
  %1412 = vrot.lane.b32.xlu0 %v1352, 8
  %v1413 = vpop.permute.xlu0 %1412
  %1414 = vrot.lane.b32.xlu0 %v1353, 8
  %v1415 = vpop.permute.xlu0 %1414
  %1416 = vrot.lane.b32.xlu0 %v1354, 8
  %v1417 = vpop.permute.xlu0 %1416
  %1418 = vrot.lane.b32.xlu0 %v1355, 8
  %v1419 = vpop.permute.xlu0 %1418
  %1420 = vrot.lane.b32.xlu0 %v1356, 8
  %v1421 = vpop.permute.xlu0 %1420
  %1422 = vrot.lane.b32.xlu0 %v1357, 8
  %v1423 = vpop.permute.xlu0 %1422
  %1424 = vrot.lane.b32.xlu0 %v1358, 8
  %v1425 = vpop.permute.xlu0 %1424
  %1426 = vrot.lane.b32.xlu0 %v1359, 8
  %v1427 = vpop.permute.xlu0 %1426
  %1428 = vrot.lane.b32.xlu0 %v1360, 8
  %v1429 = vpop.permute.xlu0 %1428
  %1430 = vrot.lane.b32.xlu0 %v1361, 8
  %v1431 = vpop.permute.xlu0 %1430
  %1432 = vrot.lane.b32.xlu0 %v1362, 8
  %v1433 = vpop.permute.xlu0 %1432
  %1434 = vrot.lane.b32.xlu0 %v1363, 8
  %v1435 = vpop.permute.xlu0 %1434
  %1436 = vrot.lane.b32.xlu0 %v1364, 8
  %v1437 = vpop.permute.xlu0 %1436
  %1438 = vrot.lane.b32.xlu0 %v1365, 8
  %v1439 = vpop.permute.xlu0 %1438
  %1440 = vrot.lane.b32.xlu0 %v1366, 8
  %v1441 = vpop.permute.xlu0 %1440
  %v1467 = vadd.f32 %v819, %v1393
  %v1468 = vadd.f32 %v824, %v1395
  %v1469 = vadd.f32 %v829, %v1397
  %v1470 = vadd.f32 %v834, %v1399
  %v1471 = vadd.f32 %v839, %v1401
  %v1472 = vadd.f32 %v844, %v1403
  %v1473 = vadd.f32 %v849, %v1405
  %v1474 = vadd.f32 %v854, %v1407
  %v1475 = vadd.f32 %v859, %v1409
  %v1476 = vadd.f32 %v864, %v1411
  %v1477 = vadd.f32 %v869, %v1413
  %v1478 = vadd.f32 %v874, %v1415
  %v1479 = vadd.f32 %v879, %v1417
  %v1480 = vadd.f32 %v884, %v1419
  %v1481 = vadd.f32 %v889, %v1421
  %v1482 = vadd.f32 %v894, %v1423
  %v1483 = vadd.f32 %v899, %v1425
  %v1484 = vadd.f32 %v904, %v1427
  %v1485 = vadd.f32 %v909, %v1429
  %v1486 = vadd.f32 %v914, %v1431
  %v1487 = vadd.f32 %v919, %v1433
  %v1488 = vadd.f32 %v924, %v1435
  %v1489 = vadd.f32 %v929, %v1437
  %v1490 = vadd.f32 %v934, %v1439
  %v1491 = vadd.f32 %v939, %v1441
  %v1492 = vmul.f32 %v1267, %v1267
  %v1493 = vmul.f32 %v1268, %v1268
  %v1494 = vmul.f32 %v1269, %v1269
  %v1495 = vmul.f32 %v1270, %v1270
  %v1496 = vmul.f32 %v1271, %v1271
  %v1497 = vmul.f32 %v1272, %v1272
  %v1498 = vmul.f32 %v1273, %v1273
  %v1499 = vmul.f32 %v1274, %v1274
  %v1500 = vmul.f32 %v1275, %v1275
  %v1501 = vmul.f32 %v1276, %v1276
  %v1502 = vmul.f32 %v1277, %v1277
  %v1503 = vmul.f32 %v1278, %v1278
  %v1504 = vmul.f32 %v1279, %v1279
  %v1505 = vmul.f32 %v1280, %v1280
  %v1506 = vmul.f32 %v1281, %v1281
  %v1507 = vmul.f32 %v1282, %v1282
  %v1508 = vmul.f32 %v1283, %v1283
  %v1509 = vmul.f32 %v1284, %v1284
  %v1510 = vmul.f32 %v1285, %v1285
  %v1511 = vmul.f32 %v1286, %v1286
  %v1512 = vmul.f32 %v1287, %v1287
  %v1513 = vmul.f32 %v1288, %v1288
  %v1514 = vmul.f32 %v1289, %v1289
  %v1515 = vmul.f32 %v1290, %v1290
  %v1516 = vmul.f32 %v1291, %v1291
  %v1517 = vsub.f32 1.0, %v1492
  %v1518 = vsub.f32 1.0, %v1493
  %v1519 = vsub.f32 1.0, %v1494
  %v1520 = vsub.f32 1.0, %v1495
  %v1521 = vsub.f32 1.0, %v1496
  %v1522 = vsub.f32 1.0, %v1497
  %v1523 = vsub.f32 1.0, %v1498
  %v1524 = vsub.f32 1.0, %v1499
  %v1525 = vsub.f32 1.0, %v1500
  %v1526 = vsub.f32 1.0, %v1501
  %v1527 = vsub.f32 1.0, %v1502
  %v1528 = vsub.f32 1.0, %v1503
  %v1529 = vsub.f32 1.0, %v1504
  %v1530 = vsub.f32 1.0, %v1505
  %v1531 = vsub.f32 1.0, %v1506
  %v1532 = vsub.f32 1.0, %v1507
  %v1533 = vsub.f32 1.0, %v1508
  %v1534 = vsub.f32 1.0, %v1509
  %v1535 = vsub.f32 1.0, %v1510
  %v1536 = vsub.f32 1.0, %v1511
  %v1537 = vsub.f32 1.0, %v1512
  %v1538 = vsub.f32 1.0, %v1513
  %v1539 = vsub.f32 1.0, %v1514
  %v1540 = vsub.f32 1.0, %v1515
  %v1541 = vsub.f32 1.0, %v1516
  %v1542 = vadd.f32 %v1517, 1e-06
  %v1543 = vadd.f32 %v1518, 1e-06
  %v1544 = vadd.f32 %v1519, 1e-06
  %v1545 = vadd.f32 %v1520, 1e-06
  %v1546 = vadd.f32 %v1521, 1e-06
  %v1547 = vadd.f32 %v1522, 1e-06
  %v1548 = vadd.f32 %v1523, 1e-06
  %v1549 = vadd.f32 %v1524, 1e-06
  %v1550 = vadd.f32 %v1525, 1e-06
  %v1551 = vadd.f32 %v1526, 1e-06
  %v1552 = vadd.f32 %v1527, 1e-06
  %v1553 = vadd.f32 %v1528, 1e-06
  %v1554 = vadd.f32 %v1529, 1e-06
  %v1555 = vadd.f32 %v1530, 1e-06
  %v1556 = vadd.f32 %v1531, 1e-06
  %v1557 = vadd.f32 %v1532, 1e-06
  %v1558 = vadd.f32 %v1533, 1e-06
  %v1559 = vadd.f32 %v1534, 1e-06
  %v1560 = vadd.f32 %v1535, 1e-06
  %v1561 = vadd.f32 %v1536, 1e-06
  %v1562 = vadd.f32 %v1537, 1e-06
  %v1563 = vadd.f32 %v1538, 1e-06
  %v1564 = vadd.f32 %v1539, 1e-06
  %v1565 = vadd.f32 %v1540, 1e-06
  %v1566 = vadd.f32 %v1541, 1e-06
  %v1567 = vlog2.pop %v1542
  %v1568 = vmul.f32 %v1567, 0.6931472
  %v1569 = vlog2.pop %v1543
  %v1570 = vmul.f32 %v1569, 0.6931472
  %v1571 = vlog2.pop %v1544
  %v1572 = vmul.f32 %v1571, 0.6931472
  %v1573 = vlog2.pop %v1545
  %v1574 = vmul.f32 %v1573, 0.6931472
  %v1575 = vlog2.pop %v1546
  %v1576 = vmul.f32 %v1575, 0.6931472
  %v1577 = vlog2.pop %v1547
  %v1578 = vmul.f32 %v1577, 0.6931472
  %v1579 = vlog2.pop %v1548
  %v1580 = vmul.f32 %v1579, 0.6931472
  %v1581 = vlog2.pop %v1549
  %v1582 = vmul.f32 %v1581, 0.6931472
  %v1583 = vlog2.pop %v1550
  %v1584 = vmul.f32 %v1583, 0.6931472
  %v1585 = vlog2.pop %v1551
  %v1586 = vmul.f32 %v1585, 0.6931472
  %v1587 = vlog2.pop %v1552
  %v1588 = vmul.f32 %v1587, 0.6931472
  %v1589 = vlog2.pop %v1553
  %v1590 = vmul.f32 %v1589, 0.6931472
  %v1591 = vlog2.pop %v1554
  %v1592 = vmul.f32 %v1591, 0.6931472
  %v1593 = vlog2.pop %v1555
  %v1594 = vmul.f32 %v1593, 0.6931472
  %v1595 = vlog2.pop %v1556
  %v1596 = vmul.f32 %v1595, 0.6931472
  %v1597 = vlog2.pop %v1557
  %v1598 = vmul.f32 %v1597, 0.6931472
  %v1599 = vlog2.pop %v1558
  %v1600 = vmul.f32 %v1599, 0.6931472
  %v1601 = vlog2.pop %v1559
  %v1602 = vmul.f32 %v1601, 0.6931472
  %v1603 = vlog2.pop %v1560
  %v1604 = vmul.f32 %v1603, 0.6931472
  %v1605 = vlog2.pop %v1561
  %v1606 = vmul.f32 %v1605, 0.6931472
  %v1607 = vlog2.pop %v1562
  %v1608 = vmul.f32 %v1607, 0.6931472
  %v1609 = vlog2.pop %v1563
  %v1610 = vmul.f32 %v1609, 0.6931472
  %v1611 = vlog2.pop %v1564
  %v1612 = vmul.f32 %v1611, 0.6931472
  %v1613 = vlog2.pop %v1565
  %v1614 = vmul.f32 %v1613, 0.6931472
  %v1615 = vlog2.pop %v1566
  %v1616 = vmul.f32 %v1615, 0.6931472
  %1642 = vrot.lane.b32.xlu0 %v1568, 8
  %v1643 = vpop.permute.xlu0 %1642
  %1644 = vrot.lane.b32.xlu0 %v1570, 8
  %v1645 = vpop.permute.xlu0 %1644
  %1646 = vrot.lane.b32.xlu0 %v1572, 8
  %v1647 = vpop.permute.xlu0 %1646
  %1648 = vrot.lane.b32.xlu0 %v1574, 8
  %v1649 = vpop.permute.xlu0 %1648
  %1650 = vrot.lane.b32.xlu0 %v1576, 8
  %v1651 = vpop.permute.xlu0 %1650
  %1652 = vrot.lane.b32.xlu0 %v1578, 8
  %v1653 = vpop.permute.xlu0 %1652
  %1654 = vrot.lane.b32.xlu0 %v1580, 8
  %v1655 = vpop.permute.xlu0 %1654
  %1656 = vrot.lane.b32.xlu0 %v1582, 8
  %v1657 = vpop.permute.xlu0 %1656
  %1658 = vrot.lane.b32.xlu0 %v1584, 8
  %v1659 = vpop.permute.xlu0 %1658
  %1660 = vrot.lane.b32.xlu0 %v1586, 8
  %v1661 = vpop.permute.xlu0 %1660
  %1662 = vrot.lane.b32.xlu0 %v1588, 8
  %v1663 = vpop.permute.xlu0 %1662
  %1664 = vrot.lane.b32.xlu0 %v1590, 8
  %v1665 = vpop.permute.xlu0 %1664
  %1666 = vrot.lane.b32.xlu0 %v1592, 8
  %v1667 = vpop.permute.xlu0 %1666
  %1668 = vrot.lane.b32.xlu0 %v1594, 8
  %v1669 = vpop.permute.xlu0 %1668
  %1670 = vrot.lane.b32.xlu0 %v1596, 8
  %v1671 = vpop.permute.xlu0 %1670
  %1672 = vrot.lane.b32.xlu0 %v1598, 8
  %v1673 = vpop.permute.xlu0 %1672
  %1674 = vrot.lane.b32.xlu0 %v1600, 8
  %v1675 = vpop.permute.xlu0 %1674
  %1676 = vrot.lane.b32.xlu0 %v1602, 8
  %v1677 = vpop.permute.xlu0 %1676
  %1678 = vrot.lane.b32.xlu0 %v1604, 8
  %v1679 = vpop.permute.xlu0 %1678
  %1680 = vrot.lane.b32.xlu0 %v1606, 8
  %v1681 = vpop.permute.xlu0 %1680
  %1682 = vrot.lane.b32.xlu0 %v1608, 8
  %v1683 = vpop.permute.xlu0 %1682
  %1684 = vrot.lane.b32.xlu0 %v1610, 8
  %v1685 = vpop.permute.xlu0 %1684
  %1686 = vrot.lane.b32.xlu0 %v1612, 8
  %v1687 = vpop.permute.xlu0 %1686
  %1688 = vrot.lane.b32.xlu0 %v1614, 8
  %v1689 = vpop.permute.xlu0 %1688
  %1690 = vrot.lane.b32.xlu0 %v1616, 8
  %v1691 = vpop.permute.xlu0 %1690
  %v1717 = vadd.f32 %v1467, %v1643
  %v1718 = vadd.f32 %v1468, %v1645
  %v1719 = vadd.f32 %v1469, %v1647
  %v1720 = vadd.f32 %v1470, %v1649
  %v1721 = vadd.f32 %v1471, %v1651
  %v1722 = vadd.f32 %v1472, %v1653
  %v1723 = vadd.f32 %v1473, %v1655
  %v1724 = vadd.f32 %v1474, %v1657
  %v1725 = vadd.f32 %v1475, %v1659
  %v1726 = vadd.f32 %v1476, %v1661
  %v1727 = vadd.f32 %v1477, %v1663
  %v1728 = vadd.f32 %v1478, %v1665
  %v1729 = vadd.f32 %v1479, %v1667
  %v1730 = vadd.f32 %v1480, %v1669
  %v1731 = vadd.f32 %v1481, %v1671
  %v1732 = vadd.f32 %v1482, %v1673
  %v1733 = vadd.f32 %v1483, %v1675
  %v1734 = vadd.f32 %v1484, %v1677
  %v1735 = vadd.f32 %v1485, %v1679
  %v1736 = vadd.f32 %v1486, %v1681
  %v1737 = vadd.f32 %v1487, %v1683
  %v1738 = vadd.f32 %v1488, %v1685
  %v1739 = vadd.f32 %v1489, %v1687
  %v1740 = vadd.f32 %v1490, %v1689
  %v1741 = vadd.f32 %v1491, %v1691
  %1767 = vrot.lane.b32.xlu0 %v1717, 120
  %v1768 = vpop.permute.xlu0 %1767
  %1769 = vrot.lane.b32.xlu0 %v1718, 120
  %v1770 = vpop.permute.xlu0 %1769
  %1771 = vrot.lane.b32.xlu0 %v1719, 120
  %v1772 = vpop.permute.xlu0 %1771
  %1773 = vrot.lane.b32.xlu0 %v1720, 120
  %v1774 = vpop.permute.xlu0 %1773
  %1775 = vrot.lane.b32.xlu0 %v1721, 120
  %v1776 = vpop.permute.xlu0 %1775
  %1777 = vrot.lane.b32.xlu0 %v1722, 120
  %v1778 = vpop.permute.xlu0 %1777
  %1779 = vrot.lane.b32.xlu0 %v1723, 120
  %v1780 = vpop.permute.xlu0 %1779
  %1781 = vrot.lane.b32.xlu0 %v1724, 120
  %v1782 = vpop.permute.xlu0 %1781
  %1783 = vrot.lane.b32.xlu0 %v1725, 120
  %v1784 = vpop.permute.xlu0 %1783
  %1785 = vrot.lane.b32.xlu0 %v1726, 120
  %v1786 = vpop.permute.xlu0 %1785
  %1787 = vrot.lane.b32.xlu0 %v1727, 120
  %v1788 = vpop.permute.xlu0 %1787
  %1789 = vrot.lane.b32.xlu0 %v1728, 120
  %v1790 = vpop.permute.xlu0 %1789
  %1791 = vrot.lane.b32.xlu0 %v1729, 120
  %v1792 = vpop.permute.xlu0 %1791
  %1793 = vrot.lane.b32.xlu0 %v1730, 120
  %v1794 = vpop.permute.xlu0 %1793
  %1795 = vrot.lane.b32.xlu0 %v1731, 120
  %v1796 = vpop.permute.xlu0 %1795
  %1797 = vrot.lane.b32.xlu0 %v1732, 120
  %v1798 = vpop.permute.xlu0 %1797
  %1799 = vrot.lane.b32.xlu0 %v1733, 120
  %v1800 = vpop.permute.xlu0 %1799
  %1801 = vrot.lane.b32.xlu0 %v1734, 120
  %v1802 = vpop.permute.xlu0 %1801
  %1803 = vrot.lane.b32.xlu0 %v1735, 120
  %v1804 = vpop.permute.xlu0 %1803
  %1805 = vrot.lane.b32.xlu0 %v1736, 120
  %v1806 = vpop.permute.xlu0 %1805
  %1807 = vrot.lane.b32.xlu0 %v1737, 120
  %v1808 = vpop.permute.xlu0 %1807
  %1809 = vrot.lane.b32.xlu0 %v1738, 120
  %v1810 = vpop.permute.xlu0 %1809
  %1811 = vrot.lane.b32.xlu0 %v1739, 120
  %v1812 = vpop.permute.xlu0 %1811
  %1813 = vrot.lane.b32.xlu0 %v1740, 120
  %v1814 = vpop.permute.xlu0 %1813
  %1815 = vrot.lane.b32.xlu0 %v1741, 120
  %v1816 = vpop.permute.xlu0 %1815
  %vm1842 = vcmask 64512
  %v1843 = vsel %vm1842, %v1768, 0.0
  %1844 = vadd.xlane.f32.xlu0 %v1843
  %v1845 = vpop.xlane.xlu0 %1844
  %v1846 = vsel %vm1842, %v1770, 0.0
  %1847 = vadd.xlane.f32.xlu0 %v1846
  %v1848 = vpop.xlane.xlu0 %1847
  %v1849 = vsel %vm1842, %v1772, 0.0
  %1850 = vadd.xlane.f32.xlu0 %v1849
  %v1851 = vpop.xlane.xlu0 %1850
  %v1852 = vsel %vm1842, %v1774, 0.0
  %1853 = vadd.xlane.f32.xlu0 %v1852
  %v1854 = vpop.xlane.xlu0 %1853
  %v1855 = vsel %vm1842, %v1776, 0.0
  %1856 = vadd.xlane.f32.xlu0 %v1855
  %v1857 = vpop.xlane.xlu0 %1856
  %v1858 = vsel %vm1842, %v1778, 0.0
  %1859 = vadd.xlane.f32.xlu0 %v1858
  %v1860 = vpop.xlane.xlu0 %1859
  %v1861 = vsel %vm1842, %v1780, 0.0
  %1862 = vadd.xlane.f32.xlu0 %v1861
  %v1863 = vpop.xlane.xlu0 %1862
  %v1864 = vsel %vm1842, %v1782, 0.0
  %1865 = vadd.xlane.f32.xlu0 %v1864
  %v1866 = vpop.xlane.xlu0 %1865
  %v1867 = vsel %vm1842, %v1784, 0.0
  %1868 = vadd.xlane.f32.xlu0 %v1867
  %v1869 = vpop.xlane.xlu0 %1868
  %v1870 = vsel %vm1842, %v1786, 0.0
  %1871 = vadd.xlane.f32.xlu0 %v1870
  %v1872 = vpop.xlane.xlu0 %1871
  %v1873 = vsel %vm1842, %v1788, 0.0
  %1874 = vadd.xlane.f32.xlu0 %v1873
  %v1875 = vpop.xlane.xlu0 %1874
  %v1876 = vsel %vm1842, %v1790, 0.0
  %1877 = vadd.xlane.f32.xlu0 %v1876
  %v1878 = vpop.xlane.xlu0 %1877
  %v1879 = vsel %vm1842, %v1792, 0.0
  %1880 = vadd.xlane.f32.xlu0 %v1879
  %v1881 = vpop.xlane.xlu0 %1880
  %v1882 = vsel %vm1842, %v1794, 0.0
  %1883 = vadd.xlane.f32.xlu0 %v1882
  %v1884 = vpop.xlane.xlu0 %1883
  %v1885 = vsel %vm1842, %v1796, 0.0
  %1886 = vadd.xlane.f32.xlu0 %v1885
  %v1887 = vpop.xlane.xlu0 %1886
  %v1888 = vsel %vm1842, %v1798, 0.0
  %1889 = vadd.xlane.f32.xlu0 %v1888
  %v1890 = vpop.xlane.xlu0 %1889
  %v1891 = vsel %vm1842, %v1800, 0.0
  %1892 = vadd.xlane.f32.xlu0 %v1891
  %v1893 = vpop.xlane.xlu0 %1892
  %v1894 = vsel %vm1842, %v1802, 0.0
  %1895 = vadd.xlane.f32.xlu0 %v1894
  %v1896 = vpop.xlane.xlu0 %1895
  %v1897 = vsel %vm1842, %v1804, 0.0
  %1898 = vadd.xlane.f32.xlu0 %v1897
  %v1899 = vpop.xlane.xlu0 %1898
  %v1900 = vsel %vm1842, %v1806, 0.0
  %1901 = vadd.xlane.f32.xlu0 %v1900
  %v1902 = vpop.xlane.xlu0 %1901
  %v1903 = vsel %vm1842, %v1808, 0.0
  %1904 = vadd.xlane.f32.xlu0 %v1903
  %v1905 = vpop.xlane.xlu0 %1904
  %v1906 = vsel %vm1842, %v1810, 0.0
  %1907 = vadd.xlane.f32.xlu0 %v1906
  %v1908 = vpop.xlane.xlu0 %1907
  %v1909 = vsel %vm1842, %v1812, 0.0
  %1910 = vadd.xlane.f32.xlu0 %v1909
  %v1911 = vpop.xlane.xlu0 %1910
  %v1912 = vsel %vm1842, %v1814, 0.0
  %1913 = vadd.xlane.f32.xlu0 %v1912
  %v1914 = vpop.xlane.xlu0 %1913
  %v1915 = vsel %vm1842, %v1816, 0.0
  %1916 = vadd.xlane.f32.xlu0 %v1915
  %v1917 = vpop.xlane.xlu0 %1916
  %v1918 = vsub.f32 -7.351508, %v1845
  %v1919 = vsub.f32 -7.351508, %v1848
  %v1920 = vsub.f32 -7.351508, %v1851
  %v1921 = vsub.f32 -7.351508, %v1854
  %v1922 = vsub.f32 -7.351508, %v1857
  %v1923 = vsub.f32 -7.351508, %v1860
  %v1924 = vsub.f32 -7.351508, %v1863
  %v1925 = vsub.f32 -7.351508, %v1866
  %v1926 = vsub.f32 -7.351508, %v1869
  %v1927 = vsub.f32 -7.351508, %v1872
  %v1928 = vsub.f32 -7.351508, %v1875
  %v1929 = vsub.f32 -7.351508, %v1878
  %v1930 = vsub.f32 -7.351508, %v1881
  %v1931 = vsub.f32 -7.351508, %v1884
  %v1932 = vsub.f32 -7.351508, %v1887
  %v1933 = vsub.f32 -7.351508, %v1890
  %v1934 = vsub.f32 -7.351508, %v1893
  %v1935 = vsub.f32 -7.351508, %v1896
  %v1936 = vsub.f32 -7.351508, %v1899
  %v1937 = vsub.f32 -7.351508, %v1902
  %v1938 = vsub.f32 -7.351508, %v1905
  %v1939 = vsub.f32 -7.351508, %v1908
  %v1940 = vsub.f32 -7.351508, %v1911
  %v1941 = vsub.f32 -7.351508, %v1914
  %v1942 = vsub.f32 -7.351508, %v1917
  %1943 = vst.msk [vmem:[%s8] sm:$0xff] %vm1842, %v1267
  %1944 = vst.msk [vmem:[%s8 + $0x8] sm:$0xff] %vm1842, %v1268
  %1945 = vst.msk [vmem:[%s8 + $0x10] sm:$0xff] %vm1842, %v1269
  %1946 = vst.msk [vmem:[%s8 + $0x18] sm:$0xff] %vm1842, %v1270
  %1947 = vst.msk [vmem:[%s8 + $0x20] sm:$0xff] %vm1842, %v1271
  %1948 = vst.msk [vmem:[%s8 + $0x28] sm:$0xff] %vm1842, %v1272
  %1949 = vst.msk [vmem:[%s8 + $0x30] sm:$0xff] %vm1842, %v1273
  %1950 = vst.msk [vmem:[%s8 + $0x38] sm:$0xff] %vm1842, %v1274
  %1951 = vst.msk [vmem:[%s8 + $0x40] sm:$0xff] %vm1842, %v1275
  %1952 = vst.msk [vmem:[%s8 + $0x48] sm:$0xff] %vm1842, %v1276
  %1953 = vst.msk [vmem:[%s8 + $0x50] sm:$0xff] %vm1842, %v1277
  %1954 = vst.msk [vmem:[%s8 + $0x58] sm:$0xff] %vm1842, %v1278
  %1955 = vst.msk [vmem:[%s8 + $0x60] sm:$0xff] %vm1842, %v1279
  %1956 = vst.msk [vmem:[%s8 + $0x68] sm:$0xff] %vm1842, %v1280
  %1957 = vst.msk [vmem:[%s8 + $0x70] sm:$0xff] %vm1842, %v1281
  %1958 = vst.msk [vmem:[%s8 + $0x78] sm:$0xff] %vm1842, %v1282
  %1959 = vst.msk [vmem:[%s8 + $0x80] sm:$0xff] %vm1842, %v1283
  %1960 = vst.msk [vmem:[%s8 + $0x88] sm:$0xff] %vm1842, %v1284
  %1961 = vst.msk [vmem:[%s8 + $0x90] sm:$0xff] %vm1842, %v1285
  %1962 = vst.msk [vmem:[%s8 + $0x98] sm:$0xff] %vm1842, %v1286
  %1963 = vst.msk [vmem:[%s8 + $0xa0] sm:$0xff] %vm1842, %v1287
  %1964 = vst.msk [vmem:[%s8 + $0xa8] sm:$0xff] %vm1842, %v1288
  %1965 = vst.msk [vmem:[%s8 + $0xb0] sm:$0xff] %vm1842, %v1289
  %1966 = vst.msk [vmem:[%s8 + $0xb8] sm:$0xff] %vm1842, %v1290
  %1967 = vst.msk [vmem:[%s8 + $0xc0] sm:$0xff] %vm1842, %v1291
  %1993 = vrot.lane.b32.xlu0 %v1292, 8
  %v1994 = vpop.permute.xlu0 %1993
  %1995 = vrot.lane.b32.xlu0 %v1293, 8
  %v1996 = vpop.permute.xlu0 %1995
  %1997 = vrot.lane.b32.xlu0 %v1294, 8
  %v1998 = vpop.permute.xlu0 %1997
  %1999 = vrot.lane.b32.xlu0 %v1295, 8
  %v2000 = vpop.permute.xlu0 %1999
  %2001 = vrot.lane.b32.xlu0 %v1296, 8
  %v2002 = vpop.permute.xlu0 %2001
  %2003 = vrot.lane.b32.xlu0 %v1297, 8
  %v2004 = vpop.permute.xlu0 %2003
  %2005 = vrot.lane.b32.xlu0 %v1298, 8
  %v2006 = vpop.permute.xlu0 %2005
  %2007 = vrot.lane.b32.xlu0 %v1299, 8
  %v2008 = vpop.permute.xlu0 %2007
  %2009 = vrot.lane.b32.xlu0 %v1300, 8
  %v2010 = vpop.permute.xlu0 %2009
  %2011 = vrot.lane.b32.xlu0 %v1301, 8
  %v2012 = vpop.permute.xlu0 %2011
  %2013 = vrot.lane.b32.xlu0 %v1302, 8
  %v2014 = vpop.permute.xlu0 %2013
  %2015 = vrot.lane.b32.xlu0 %v1303, 8
  %v2016 = vpop.permute.xlu0 %2015
  %2017 = vrot.lane.b32.xlu0 %v1304, 8
  %v2018 = vpop.permute.xlu0 %2017
  %2019 = vrot.lane.b32.xlu0 %v1305, 8
  %v2020 = vpop.permute.xlu0 %2019
  %2021 = vrot.lane.b32.xlu0 %v1306, 8
  %v2022 = vpop.permute.xlu0 %2021
  %2023 = vrot.lane.b32.xlu0 %v1307, 8
  %v2024 = vpop.permute.xlu0 %2023
  %2025 = vrot.lane.b32.xlu0 %v1308, 8
  %v2026 = vpop.permute.xlu0 %2025
  %2027 = vrot.lane.b32.xlu0 %v1309, 8
  %v2028 = vpop.permute.xlu0 %2027
  %2029 = vrot.lane.b32.xlu0 %v1310, 8
  %v2030 = vpop.permute.xlu0 %2029
  %2031 = vrot.lane.b32.xlu0 %v1311, 8
  %v2032 = vpop.permute.xlu0 %2031
  %2033 = vrot.lane.b32.xlu0 %v1312, 8
  %v2034 = vpop.permute.xlu0 %2033
  %2035 = vrot.lane.b32.xlu0 %v1313, 8
  %v2036 = vpop.permute.xlu0 %2035
  %2037 = vrot.lane.b32.xlu0 %v1314, 8
  %v2038 = vpop.permute.xlu0 %2037
  %2039 = vrot.lane.b32.xlu0 %v1315, 8
  %v2040 = vpop.permute.xlu0 %2039
  %2041 = vrot.lane.b32.xlu0 %v1316, 8
  %v2042 = vpop.permute.xlu0 %2041
  %vm2068 = vcmask 130112
  %2069 = vst.msk [vmem:[%s8] sm:$0xff] %vm2068, %v1994
  %2070 = vst.msk [vmem:[%s8 + $0x8] sm:$0xff] %vm2068, %v1996
  %2071 = vst.msk [vmem:[%s8 + $0x10] sm:$0xff] %vm2068, %v1998
  %2072 = vst.msk [vmem:[%s8 + $0x18] sm:$0xff] %vm2068, %v2000
  %2073 = vst.msk [vmem:[%s8 + $0x20] sm:$0xff] %vm2068, %v2002
  %2074 = vst.msk [vmem:[%s8 + $0x28] sm:$0xff] %vm2068, %v2004
  %2075 = vst.msk [vmem:[%s8 + $0x30] sm:$0xff] %vm2068, %v2006
  %2076 = vst.msk [vmem:[%s8 + $0x38] sm:$0xff] %vm2068, %v2008
  %2077 = vst.msk [vmem:[%s8 + $0x40] sm:$0xff] %vm2068, %v2010
  %2078 = vst.msk [vmem:[%s8 + $0x48] sm:$0xff] %vm2068, %v2012
  %2079 = vst.msk [vmem:[%s8 + $0x50] sm:$0xff] %vm2068, %v2014
  %2080 = vst.msk [vmem:[%s8 + $0x58] sm:$0xff] %vm2068, %v2016
  %2081 = vst.msk [vmem:[%s8 + $0x60] sm:$0xff] %vm2068, %v2018
  %2082 = vst.msk [vmem:[%s8 + $0x68] sm:$0xff] %vm2068, %v2020
  %2083 = vst.msk [vmem:[%s8 + $0x70] sm:$0xff] %vm2068, %v2022
  %2084 = vst.msk [vmem:[%s8 + $0x78] sm:$0xff] %vm2068, %v2024
  %2085 = vst.msk [vmem:[%s8 + $0x80] sm:$0xff] %vm2068, %v2026
  %2086 = vst.msk [vmem:[%s8 + $0x88] sm:$0xff] %vm2068, %v2028
  %2087 = vst.msk [vmem:[%s8 + $0x90] sm:$0xff] %vm2068, %v2030
  %2088 = vst.msk [vmem:[%s8 + $0x98] sm:$0xff] %vm2068, %v2032
  %2089 = vst.msk [vmem:[%s8 + $0xa0] sm:$0xff] %vm2068, %v2034
  %2090 = vst.msk [vmem:[%s8 + $0xa8] sm:$0xff] %vm2068, %v2036
  %2091 = vst.msk [vmem:[%s8 + $0xb0] sm:$0xff] %vm2068, %v2038
  %2092 = vst.msk [vmem:[%s8 + $0xb8] sm:$0xff] %vm2068, %v2040
  %2093 = vst.msk [vmem:[%s8 + $0xc0] sm:$0xff] %vm2068, %v2042
  %vm2094 = vcmask 138368
  %2095 = vst.msk [vmem:[%s8] sm:$0xff] %vm2094, %v1918
  %2096 = vst.msk [vmem:[%s8 + $0x8] sm:$0xff] %vm2094, %v1919
  %2097 = vst.msk [vmem:[%s8 + $0x10] sm:$0xff] %vm2094, %v1920
  %2098 = vst.msk [vmem:[%s8 + $0x18] sm:$0xff] %vm2094, %v1921
  %2099 = vst.msk [vmem:[%s8 + $0x20] sm:$0xff] %vm2094, %v1922
  %2100 = vst.msk [vmem:[%s8 + $0x28] sm:$0xff] %vm2094, %v1923
  %2101 = vst.msk [vmem:[%s8 + $0x30] sm:$0xff] %vm2094, %v1924
  %2102 = vst.msk [vmem:[%s8 + $0x38] sm:$0xff] %vm2094, %v1925
  %2103 = vst.msk [vmem:[%s8 + $0x40] sm:$0xff] %vm2094, %v1926
  %2104 = vst.msk [vmem:[%s8 + $0x48] sm:$0xff] %vm2094, %v1927
  %2105 = vst.msk [vmem:[%s8 + $0x50] sm:$0xff] %vm2094, %v1928
  %2106 = vst.msk [vmem:[%s8 + $0x58] sm:$0xff] %vm2094, %v1929
  %2107 = vst.msk [vmem:[%s8 + $0x60] sm:$0xff] %vm2094, %v1930
  %2108 = vst.msk [vmem:[%s8 + $0x68] sm:$0xff] %vm2094, %v1931
  %2109 = vst.msk [vmem:[%s8 + $0x70] sm:$0xff] %vm2094, %v1932
  %2110 = vst.msk [vmem:[%s8 + $0x78] sm:$0xff] %vm2094, %v1933
  %2111 = vst.msk [vmem:[%s8 + $0x80] sm:$0xff] %vm2094, %v1934
  %2112 = vst.msk [vmem:[%s8 + $0x88] sm:$0xff] %vm2094, %v1935
  %2113 = vst.msk [vmem:[%s8 + $0x90] sm:$0xff] %vm2094, %v1936
  %2114 = vst.msk [vmem:[%s8 + $0x98] sm:$0xff] %vm2094, %v1937
  %2115 = vst.msk [vmem:[%s8 + $0xa0] sm:$0xff] %vm2094, %v1938
  %2116 = vst.msk [vmem:[%s8 + $0xa8] sm:$0xff] %vm2094, %v1939
  %2117 = vst.msk [vmem:[%s8 + $0xb0] sm:$0xff] %vm2094, %v1940
  %2118 = vst.msk [vmem:[%s8 + $0xb8] sm:$0xff] %vm2094, %v1941
  %2119 = vst.msk [vmem:[%s8 + $0xc0] sm:$0xff] %vm2094, %v1942
  // Predicated region
  $region34: #{actor_forward.1} parent=0 // pred_check
    _
  $region35: #{actor_forward.1} parent=0 // pred_check_branch
    %2121 = sbr.rel (0) target = $region37
  $region36: #{actor_forward.1} parent=0 // pred_region
    _
  $region37: #{actor_forward.1} parent=0 // pred_fallthru
    _
  // Predicated region
  $region38: #{actor_forward.1} parent=0 // pred_check
    _
  $region39: #{actor_forward.1} parent=0 // pred_check_branch
    %2123 = sbr.rel (0) target = $region41
  $region40: #{actor_forward.1} parent=0 // pred_region
    _
  $region41: #{actor_forward.1} parent=0 // pred_fallthru
    _

</llo_original>
